<compile_context>
chip_gen: v7x
topology: tpu7x:2x2x1
jax: 0.10.0
libtpu: 0.0.40
codegen_flags: <defaults>
</compile_context>

<pallas_src>
import functools

import jax
import jax.numpy as jnp
from jax.experimental import pallas as pl
from jax.experimental.pallas import tpu as pltpu


# ------------------------------ helpers ------------------------------------

_VMEM_LIMIT = 32 * 1024 * 1024  # safe on v5e/v6e (128 MiB) and v7x (64 MiB)


def _is_tpu_v5e():
    try:
        kind = jax.devices()[0].device_kind.lower()
    except Exception:
        return False
    return ("v5e" in kind) or ("v5 lite" in kind) or ("v5lite" in kind)


def _pick_tile(m, tile_m, min_steps=8):
    """Row tile: multiple of 8, <= tile_m, giving >= min_steps grid steps."""
    if m <= 8 * min_steps:
        return m                      # tiny problem: one full-array block
    tm = min(tile_m, m // min_steps)
    return max(8, (tm // 8) * 8)


def _segmented_allreduce(x, masks, op):
    """Each lane ends up holding op-reduction over its contiguous segment.

    Segments are 2**len(masks) aligned contiguous lanes.  masks[j] is True
    where bit j of the lane index is 0.  XOR butterfly built from pltpu.roll
    (XLU slot), row stays lane-dense.  Only used on v5e.
    """
    n = x.shape[-1]
    axis = x.ndim - 1                 # pltpu.roll needs a non-negative axis
    k = 1
    for m in masks:
        fwd = pltpu.roll(x, shift=n - k, axis=axis)   # lane i <- x[(i+k) % n]
        bwd = pltpu.roll(x, shift=k, axis=axis)       # lane i <- x[(i-k) % n]
        x = op(x, jnp.where(m, fwd, bwd))
        k *= 2
    return x


# ------------------------------ kernels -------------------------------------

def _linear_kernel(x_ref, w_ref, b_ref, o_ref):
    # f32 activation tile -> bf16 on the VPU (hidden under the MXU), f32 acc.
    xb = x_ref[...].astype(jnp.bfloat16)
    acc = jnp.dot(xb, w_ref[...], preferred_element_type=jnp.float32)
    o_ref[...] = (acc + b_ref[...]).astype(o_ref.dtype)


def _query_kernel_mxu(x_ref, w_off_ref, b_off_ref, w_attn_ref, b_attn_ref,
                      seg_ref, off_ref, attn_ref):
    xb = x_ref[...].astype(jnp.bfloat16)

    # sampling offsets: compute + store immediately (no (tm, 768) live acc).
    off = jnp.dot(xb, w_off_ref[...], preferred_element_type=jnp.float32)
    off_ref[...] = (off + b_off_ref[...]).astype(off_ref.dtype)

    # attention logits + grouped softmax, all lane-dense.
    logits = jnp.dot(xb, w_attn_ref[...], preferred_element_type=jnp.float32)
    logits = logits + b_attn_ref[...]
    # Full-row max is constant within every head segment -> valid softmax
    # shift; native lane reduce, no cross-lane shuffles.  (Per-segment exps
    # could only underflow if a segment sits >80 log-units below the row max.)
    m = jnp.max(logits, axis=-1, keepdims=True)
    e = jnp.exp(logits - m)
    # Segmented sum on the MXU via a resident block-diagonal ones matrix.
    s = jnp.dot(e.astype(jnp.bfloat16), seg_ref[...],
                preferred_element_type=jnp.float32)
    attn_ref[...] = (e * pl.reciprocal(s, approx=True)).astype(attn_ref.dtype)


def _query_kernel_xlu(x_ref, w_off_ref, b_off_ref, w_attn_ref, b_attn_ref,
                      off_ref, attn_ref, *, group_size):
    # v5e path: keep the segmented softmax on the XLUs (MXU is the binding
    # unit there), via the roll-based XOR butterfly.
    xb = x_ref[...].astype(jnp.bfloat16)

    off = jnp.dot(xb, w_off_ref[...], preferred_element_type=jnp.float32)
    off_ref[...] = (off + b_off_ref[...]).astype(off_ref.dtype)

    logits = jnp.dot(xb, w_attn_ref[...], preferred_element_type=jnp.float32)
    logits = logits + b_attn_ref[...]

    lane = jax.lax.broadcasted_iota(jnp.int32, logits.shape, logits.ndim - 1)
    masks = []
    k = 1
    while k < group_size:
        masks.append((lane & k) == 0)
        k *= 2
    m = _segmented_allreduce(logits, masks, jnp.maximum)
    e = jnp.exp(logits - m)
    s = _segmented_allreduce(e, masks, jnp.add)
    attn_ref[...] = (e * pl.reciprocal(s, approx=True)).astype(attn_ref.dtype)


# ------------------------------ wrappers -------------------------------------

def pallas_linear(x, w, b, *, tile_m=512, out_dtype=jnp.float32):
    """y = x @ w + b.   x: (M, K) f32, w: (K, N) bf16, b: (N,) f32."""
    M, K = x.shape
    K2, N = w.shape
    assert K == K2
    tm = _pick_tile(M, tile_m)
    grid = (pl.cdiv(M, tm),)
    cost = pl.CostEstimate(
        flops=2 * M * K * N,
        transcendentals=0,
        bytes_accessed=int(M * K * 4 + K * N * 2 + N * 4 +
                           M * N * jnp.dtype(out_dtype).itemsize))
    return pl.pallas_call(
        _linear_kernel,
        out_shape=jax.ShapeDtypeStruct((M, N), out_dtype),
        grid_spec=pltpu.PrefetchScalarGridSpec(
            num_scalar_prefetch=0,
            grid=grid,
            in_specs=[
                pl.BlockSpec((tm, K), lambda i: (i, 0)),   # activation tile
                pl.BlockSpec((K, N), lambda i: (0, 0)),    # resident weight
                pl.BlockSpec((1, N), lambda i: (0, 0)),    # bias row
            ],
            out_specs=pl.BlockSpec((tm, N), lambda i: (i, 0)),
        ),
        compiler_params=pltpu.CompilerParams(
            dimension_semantics=("parallel",),
            vmem_limit_bytes=_VMEM_LIMIT),
        cost_estimate=cost,
    )(x, w, b.reshape(1, N))


def pallas_query_fused(x, w_off, b_off, w_attn, b_attn, seg_ones, *,
                       group_size, softmax_on_mxu=True, tile_m=512,
                       out_dtype=jnp.float32):
    """Fused sampling_offsets + attention_weights projection (+ softmax).

    x: (M, K) f32, w_off: (K, off_dim) bf16, w_attn: (K, attn_dim) bf16,
    biases f32, seg_ones: (attn_dim, attn_dim) bf16 block-diagonal ones.
    Returns (offsets (M, off_dim), softmaxed attn (M, attn_dim)).
    """
    M, K = x.shape
    off_dim = w_off.shape[1]
    attn_dim = w_attn.shape[1]
    assert w_off.shape[0] == K and w_attn.shape[0] == K
    assert off_dim % 128 == 0 and attn_dim % 128 == 0, \
        "outputs must stay lane-dense (multiples of 128)"
    assert attn_dim % group_size == 0

    tm = _pick_tile(M, tile_m)
    grid = (pl.cdiv(M, tm),)

    x_spec = pl.BlockSpec((tm, K), lambda i: (i, 0))
    w_off_spec = pl.BlockSpec((K, off_dim), lambda i: (0, 0))
    b_off_spec = pl.BlockSpec((1, off_dim), lambda i: (0, 0))
    w_attn_spec = pl.BlockSpec((K, attn_dim), lambda i: (0, 0))
    b_attn_spec = pl.BlockSpec((1, attn_dim), lambda i: (0, 0))

    if softmax_on_mxu:
        kernel = _query_kernel_mxu
        in_specs = [x_spec, w_off_spec, b_off_spec, w_attn_spec, b_attn_spec,
                    pl.BlockSpec((attn_dim, attn_dim), lambda i: (0, 0))]
        operands = (x, w_off, b_off.reshape(1, off_dim), w_attn,
                    b_attn.reshape(1, attn_dim), seg_ones)
        extra_flops = 2 * M * attn_dim * attn_dim   # segmented-sum matmul
    else:
        assert group_size & (group_size - 1) == 0, \
            "XLU butterfly softmax needs a power-of-two group size"
        kernel = functools.partial(_query_kernel_xlu, group_size=group_size)
        in_specs = [x_spec, w_off_spec, b_off_spec, w_attn_spec, b_attn_spec]
        operands = (x, w_off, b_off.reshape(1, off_dim), w_attn,
                    b_attn.reshape(1, attn_dim))
        extra_flops = 0

    out_itemsize = jnp.dtype(out_dtype).itemsize
    cost = pl.CostEstimate(
        flops=2 * M * K * (off_dim + attn_dim) + extra_flops,
        transcendentals=2 * M * attn_dim,   # exp + approx reciprocal
        bytes_accessed=int(M * K * 4 + K * (off_dim + attn_dim) * 2 +
                           (off_dim + attn_dim) * 4 +
                           M * (off_dim + attn_dim) * out_itemsize))

    return pl.pallas_call(
        kernel,
        out_shape=(jax.ShapeDtypeStruct((M, off_dim), out_dtype),
                   jax.ShapeDtypeStruct((M, attn_dim), out_dtype)),
        grid_spec=pltpu.PrefetchScalarGridSpec(
            num_scalar_prefetch=0,
            grid=grid,
            in_specs=in_specs,
            out_specs=(pl.BlockSpec((tm, off_dim), lambda i: (i, 0)),
                       pl.BlockSpec((tm, attn_dim), lambda i: (i, 0))),
        ),
        compiler_params=pltpu.CompilerParams(
            dimension_semantics=("parallel",),
            vmem_limit_bytes=_VMEM_LIMIT),
        cost_estimate=cost,
    )(*operands)


# --------------------------- Module (JAX glue) -------------------------------

class MSDeformableAttention3DPallas:
    def __init__(self, key, embed_dims=256, num_heads=8, num_levels=4,
                 num_points=8, tile_m=512, out_dtype=jnp.float32,
                 softmax_on_mxu=None):
        if embed_dims % num_heads != 0:
            raise ValueError("embed_dims must be divisible by num_heads")
        self.embed_dims = embed_dims
        self.num_heads = num_heads
        self.num_levels = num_levels
        self.num_points = num_points
        self.tile_m = tile_m
        self.out_dtype = out_dtype

        group_size = num_levels * num_points
        pow2_group = (group_size & (group_size - 1)) == 0
        if softmax_on_mxu is None:
            # v5e is MXU-bound on the fused projection -> keep the segmented
            # softmax on its idle XLUs; v6e/v7x (and unknown/CPU) use the MXU.
            softmax_on_mxu = (not _is_tpu_v5e()) or (not pow2_group)
        self.softmax_on_mxu = bool(softmax_on_mxu)

        def init_linear(k, fan_in, fan_out):
            # PyTorch nn.Linear default init: U(-1/sqrt(fan_in), 1/sqrt(fan_in))
            kw, kb = jax.random.split(k)
            bound = 1.0 / jnp.sqrt(fan_in)
            w = jax.random.uniform(kw, (fan_in, fan_out), jnp.float32,
                                   -bound, bound)
            b = jax.random.uniform(kb, (fan_out,), jnp.float32, -bound, bound)
            return w, b

        k_off, k_attn, k_val = jax.random.split(key, 3)
        self.off_dim = num_heads * num_levels * num_points * 2
        self.attn_dim = num_heads * num_levels * num_points
        self.w_off, self.b_off = init_linear(k_off, embed_dims, self.off_dim)
        self.w_attn, self.b_attn = init_linear(k_attn, embed_dims,
                                               self.attn_dim)
        self.w_val, self.b_val = init_linear(k_val, embed_dims, embed_dims)

        # bf16 copies for the MXU (f32 masters kept for the reference check).
        self.w_off_bf16 = self.w_off.astype(jnp.bfloat16)
        self.w_attn_bf16 = self.w_attn.astype(jnp.bfloat16)
        self.w_val_bf16 = self.w_val.astype(jnp.bfloat16)

        # Block-diagonal ones (attn_dim, attn_dim): segmented sum on the MXU.
        idx = jnp.arange(self.attn_dim)
        self.seg_ones_bf16 = (idx[:, None] // group_size ==
                              idx[None, :] // group_size).astype(jnp.bfloat16)

    def __call__(self, query, value):
        bs, num_query, _ = query.shape
        _, num_value, _ = value.shape

        # f32 activations go straight into the kernels (cast to bf16 in-kernel).
        q2 = query.reshape(bs * num_query, self.embed_dims)
        v2 = value.reshape(bs * num_value, self.embed_dims)

        # value_proj
        value_out = pallas_linear(v2, self.w_val_bf16, self.b_val,
                                  tile_m=self.tile_m, out_dtype=self.out_dtype)
        value_out = value_out.reshape(bs, num_value, self.num_heads, -1)

        # fused sampling_offsets + attention_weights (softmax done in-kernel)
        off, attn = pallas_query_fused(
            q2, self.w_off_bf16, self.b_off, self.w_attn_bf16, self.b_attn,
            self.seg_ones_bf16,
            group_size=self.num_levels * self.num_points,
            softmax_on_mxu=self.softmax_on_mxu,
            tile_m=self.tile_m, out_dtype=self.out_dtype)
        sampling_offsets = off.reshape(bs, num_query, self.num_heads,
                                       self.num_levels, self.num_points, 2)
        attention_weights = attn.reshape(bs, num_query, self.num_heads,
                                         self.num_levels, self.num_points)
        return value_out, sampling_offsets, attention_weights


# -------------------------------- Reference ----------------------------------

def reference_forward(mod, query, value):
    """Pure f32 reference matching the PyTorch module's forward."""
    bs, num_query, _ = query.shape
    _, num_value, _ = value.shape
    q2 = query.reshape(bs * num_query, -1)
    v2 = value.reshape(bs * num_value, -1)
    hp = jax.lax.Precision.HIGHEST

    v_out = (jnp.dot(v2, mod.w_val, precision=hp) + mod.b_val).reshape(
        bs, num_value, mod.num_heads, -1)
    so = (jnp.dot(q2, mod.w_off, precision=hp) + mod.b_off).reshape(
        bs, num_query, mod.num_heads, mod.num_levels, mod.num_points, 2)
    aw = (jnp.dot(q2, mod.w_attn, precision=hp) + mod.b_attn).reshape(
        bs * num_query * mod.num_heads, mod.num_levels * mod.num_points)
    aw = jax.nn.softmax(aw, axis=-1).reshape(
        bs, num_query, mod.num_heads, mod.num_levels, mod.num_points)
    return v_out, so, aw


# ---------------------------------- Main -------------------------------------

if __name__ == "__main__":
    # Small shapes consistent with the module's forward (embed_dims stays 256
    # so head/level/point reshapes are faithful; bs/seq shrunk for speed but
    # large enough that every pallas_call runs a multi-step pipelined grid).
    bs = 2
    num_query = 512
    num_value = 256
    embed_dims = 256

    key = jax.random.PRNGKey(0)
    k_q, k_v, k_param = jax.random.split(key, 3)
    query = jax.random.normal(k_q, (bs, num_query, embed_dims), jnp.float32)
    value = jax.random.normal(k_v, (bs, num_value, embed_dims), jnp.float32)

    mod = MSDeformableAttention3DPallas(k_param, embed_dims=embed_dims,
                                        num_heads=8, num_levels=4,
                                        num_points=8, tile_m=512)

    fwd = jax.jit(lambda q, v: mod(q, v))
    out = jax.block_until_ready(fwd(query, value))

    ref = reference_forward(mod, query, value)
    names = ("value", "sampling_offsets", "attention_weights")
    # bf16 matmul operands (f32 accumulate) -> compare against the pure-f32
    # reference with a bf16-level tolerance.
    for name, got, want in zip(names, out, ref):
        assert got.shape == want.shape, (name, got.shape, want.shape)
        got32 = got.astype(jnp.float32)
        err = float(jnp.max(jnp.abs(got32 - want)))
        assert jnp.allclose(got32, want, atol=2e-2, rtol=2e-2), (name, err)

    print("KERNEL_OK")
</pallas_src>

<mosaic_0001>
module attributes {stable_mosaic.version = 11 : i64} {
  func.func @_query_kernel_mxu(%arg0: i32, %arg1: memref<128x256xf32, #tpu.memory_space<vmem>>, %arg2: memref<256x512xbf16, #tpu.memory_space<vmem>>, %arg3: memref<1x512xf32, #tpu.memory_space<vmem>>, %arg4: memref<256x256xbf16, #tpu.memory_space<vmem>>, %arg5: memref<1x256xf32, #tpu.memory_space<vmem>>, %arg6: memref<256x256xbf16, #tpu.memory_space<vmem>>, %arg7: memref<128x512xf32, #tpu.memory_space<vmem>>, %arg8: memref<128x256xf32, #tpu.memory_space<vmem>>) attributes {dimension_semantics = [#tpu.dimension_semantics<parallel>], iteration_bounds = array<i64: 8>, scalar_prefetch = 0 : i64, scratch_operands = 0 : i64, tpu.core_type = #tpu.core_type<tc>, window_params = [{transform_indices = @transform_0, window_bounds = array<i64: 128, 256>}, {pipeline_mode = #tpu.pipeline_mode<synchronous>, transform_indices = @transform_1, window_bounds = array<i64: 256, 512>}, {pipeline_mode = #tpu.pipeline_mode<synchronous>, transform_indices = @transform_2, window_bounds = array<i64: 1, 512>}, {pipeline_mode = #tpu.pipeline_mode<synchronous>, transform_indices = @transform_3, window_bounds = array<i64: 256, 256>}, {pipeline_mode = #tpu.pipeline_mode<synchronous>, transform_indices = @transform_4, window_bounds = array<i64: 1, 256>}, {pipeline_mode = #tpu.pipeline_mode<synchronous>, transform_indices = @transform_5, window_bounds = array<i64: 256, 256>}, {transform_indices = @transform_6, window_bounds = array<i64: 128, 512>}, {transform_indices = @transform_7, window_bounds = array<i64: 128, 256>}]} {
    %c0 = arith.constant 0 : index
    %c0_0 = arith.constant 0 : index
    %0 = vector.load %arg1[%c0, %c0_0] : memref<128x256xf32, #tpu.memory_space<vmem>>, vector<128x256xf32>
    %1 = arith.truncf %0 : vector<128x256xf32> to vector<128x256xbf16>
    %c0_1 = arith.constant 0 : index
    %c0_2 = arith.constant 0 : index
    %2 = vector.load %arg2[%c0_1, %c0_2] : memref<256x512xbf16, #tpu.memory_space<vmem>>, vector<256x512xbf16>
    %cst = arith.constant dense<0.000000e+00> : vector<128x512xf32>
    %3 = tpu.matmul %1, %2, %cst {dimension_numbers = #tpu.dot_dimension_numbers<[1], [0], [0], [1], [0, 0, 1, 1], [], []>} : vector<128x256xbf16>, vector<256x512xbf16>, vector<128x512xf32> -> vector<128x512xf32>
    %c0_3 = arith.constant 0 : index
    %c0_4 = arith.constant 0 : index
    %4 = vector.load %arg3[%c0_3, %c0_4] : memref<1x512xf32, #tpu.memory_space<vmem>>, vector<1x512xf32>
    %5 = vector.broadcast %4 : vector<1x512xf32> to vector<128x512xf32>
    %6 = arith.addf %3, %5 : vector<128x512xf32>
    %c0_5 = arith.constant 0 : index
    %c0_6 = arith.constant 0 : index
    %7 = vector.load %arg7[%c0_5, %c0_6] : memref<128x512xf32, #tpu.memory_space<vmem>>, vector<128x512xf32>
    tpu.vector_store %arg7[%c0_5, %c0_6], %6 {strides = array<i32>} : memref<128x512xf32, #tpu.memory_space<vmem>>, vector<128x512xf32>,
    %c0_7 = arith.constant 0 : index
    %c0_8 = arith.constant 0 : index
    %8 = vector.load %arg4[%c0_7, %c0_8] : memref<256x256xbf16, #tpu.memory_space<vmem>>, vector<256x256xbf16>
    %cst_9 = arith.constant dense<0.000000e+00> : vector<128x256xf32>
    %9 = tpu.matmul %1, %8, %cst_9 {dimension_numbers = #tpu.dot_dimension_numbers<[1], [0], [0], [1], [0, 0, 1, 1], [], []>} : vector<128x256xbf16>, vector<256x256xbf16>, vector<128x256xf32> -> vector<128x256xf32>
    %c0_10 = arith.constant 0 : index
    %c0_11 = arith.constant 0 : index
    %10 = vector.load %arg5[%c0_10, %c0_11] : memref<1x256xf32, #tpu.memory_space<vmem>>, vector<1x256xf32>
    %11 = vector.broadcast %10 : vector<1x256xf32> to vector<128x256xf32>
    %12 = arith.addf %9, %11 : vector<128x256xf32>
    %cst_12 = arith.constant dense<0xFF800000> : vector<128xf32>
    %13 = vector.multi_reduction <maximumf>, %12, %cst_12 [1] : vector<128x256xf32> to vector<128xf32>
    %14 = vector.shape_cast %13 : vector<128xf32> to vector<128x1xf32>
    %15 = vector.broadcast %14 : vector<128x1xf32> to vector<128x256xf32>
    %16 = arith.subf %12, %15 : vector<128x256xf32>
    %17 = math.exp %16 : vector<128x256xf32>
    %18 = arith.truncf %17 : vector<128x256xf32> to vector<128x256xbf16>
    %c0_13 = arith.constant 0 : index
    %c0_14 = arith.constant 0 : index
    %19 = vector.load %arg6[%c0_13, %c0_14] : memref<256x256xbf16, #tpu.memory_space<vmem>>, vector<256x256xbf16>
    %cst_15 = arith.constant dense<0.000000e+00> : vector<128x256xf32>
    %20 = tpu.matmul %18, %19, %cst_15 {dimension_numbers = #tpu.dot_dimension_numbers<[1], [0], [0], [1], [0, 0, 1, 1], [], []>} : vector<128x256xbf16>, vector<256x256xbf16>, vector<128x256xf32> -> vector<128x256xf32>
    %21 = tpu.reciprocal %20 {approx = true} : vector<128x256xf32> -> vector<128x256xf32>
    %22 = arith.mulf %17, %21 : vector<128x256xf32>
    %c0_16 = arith.constant 0 : index
    %c0_17 = arith.constant 0 : index
    %23 = vector.load %arg8[%c0_16, %c0_17] : memref<128x256xf32, #tpu.memory_space<vmem>>, vector<128x256xf32>
    tpu.vector_store %arg8[%c0_16, %c0_17], %22 {strides = array<i32>} : memref<128x256xf32, #tpu.memory_space<vmem>>, vector<128x256xf32>,
    return
  }
  func.func @transform_0(%arg0: i32) -> (i32, i32) {
    %c0_i32 = arith.constant 0 : i32
    %c0_i32_0 = arith.constant 0 : i32
    return %arg0, %c0_i32 : i32, i32
  }
  func.func @transform_1(%arg0: i32) -> (i32, i32) {
    %c0_i32 = arith.constant 0 : i32
    %c0_i32_0 = arith.constant 0 : i32
    %c0_i32_1 = arith.constant 0 : i32
    return %c0_i32, %c0_i32_0 : i32, i32
  }
  func.func @transform_2(%arg0: i32) -> (i32, i32) {
    %c0_i32 = arith.constant 0 : i32
    %c0_i32_0 = arith.constant 0 : i32
    %c0_i32_1 = arith.constant 0 : i32
    return %c0_i32, %c0_i32_0 : i32, i32
  }
  func.func @transform_3(%arg0: i32) -> (i32, i32) {
    %c0_i32 = arith.constant 0 : i32
    %c0_i32_0 = arith.constant 0 : i32
    %c0_i32_1 = arith.constant 0 : i32
    return %c0_i32, %c0_i32_0 : i32, i32
  }
  func.func @transform_4(%arg0: i32) -> (i32, i32) {
    %c0_i32 = arith.constant 0 : i32
    %c0_i32_0 = arith.constant 0 : i32
    %c0_i32_1 = arith.constant 0 : i32
    return %c0_i32, %c0_i32_0 : i32, i32
  }
  func.func @transform_5(%arg0: i32) -> (i32, i32) {
    %c0_i32 = arith.constant 0 : i32
    %c0_i32_0 = arith.constant 0 : i32
    %c0_i32_1 = arith.constant 0 : i32
    return %c0_i32, %c0_i32_0 : i32, i32
  }
  func.func @transform_6(%arg0: i32) -> (i32, i32) {
    %c0_i32 = arith.constant 0 : i32
    %c0_i32_0 = arith.constant 0 : i32
    return %arg0, %c0_i32 : i32, i32
  }
  func.func @transform_7(%arg0: i32) -> (i32, i32) {
    %c0_i32 = arith.constant 0 : i32
    %c0_i32_0 = arith.constant 0 : i32
    return %arg0, %c0_i32 : i32, i32
  }
}

module attributes {stable_mosaic.version = 11 : i64} {
  func.func @_linear_kernel(%arg0: i32, %arg1: memref<64x256xf32, #tpu.memory_space<vmem>>, %arg2: memref<256x256xbf16, #tpu.memory_space<vmem>>, %arg3: memref<1x256xf32, #tpu.memory_space<vmem>>, %arg4: memref<64x256xf32, #tpu.memory_space<vmem>>) attributes {dimension_semantics = [#tpu.dimension_semantics<parallel>], iteration_bounds = array<i64: 8>, scalar_prefetch = 0 : i64, scratch_operands = 0 : i64, tpu.core_type = #tpu.core_type<tc>, window_params = [{transform_indices = @transform_0, window_bounds = array<i64: 64, 256>}, {pipeline_mode = #tpu.pipeline_mode<synchronous>, transform_indices = @transform_1, window_bounds = array<i64: 256, 256>}, {pipeline_mode = #tpu.pipeline_mode<synchronous>, transform_indices = @transform_2, window_bounds = array<i64: 1, 256>}, {transform_indices = @transform_3, window_bounds = array<i64: 64, 256>}]} {
    %c0 = arith.constant 0 : index
    %c0_0 = arith.constant 0 : index
    %0 = vector.load %arg1[%c0, %c0_0] : memref<64x256xf32, #tpu.memory_space<vmem>>, vector<64x256xf32>
    %1 = arith.truncf %0 : vector<64x256xf32> to vector<64x256xbf16>
    %c0_1 = arith.constant 0 : index
    %c0_2 = arith.constant 0 : index
    %2 = vector.load %arg2[%c0_1, %c0_2] : memref<256x256xbf16, #tpu.memory_space<vmem>>, vector<256x256xbf16>
    %cst = arith.constant dense<0.000000e+00> : vector<64x256xf32>
    %3 = tpu.matmul %1, %2, %cst {dimension_numbers = #tpu.dot_dimension_numbers<[1], [0], [0], [1], [0, 0, 1, 1], [], []>} : vector<64x256xbf16>, vector<256x256xbf16>, vector<64x256xf32> -> vector<64x256xf32>
    %c0_3 = arith.constant 0 : index
    %c0_4 = arith.constant 0 : index
    %4 = vector.load %arg3[%c0_3, %c0_4] : memref<1x256xf32, #tpu.memory_space<vmem>>, vector<1x256xf32>
    %5 = vector.broadcast %4 : vector<1x256xf32> to vector<64x256xf32>
    %6 = arith.addf %3, %5 : vector<64x256xf32>
    %c0_5 = arith.constant 0 : index
    %c0_6 = arith.constant 0 : index
    %7 = vector.load %arg4[%c0_5, %c0_6] : memref<64x256xf32, #tpu.memory_space<vmem>>, vector<64x256xf32>
    tpu.vector_store %arg4[%c0_5, %c0_6], %6 {strides = array<i32>} : memref<64x256xf32, #tpu.memory_space<vmem>>, vector<64x256xf32>,
    return
  }
  func.func @transform_0(%arg0: i32) -> (i32, i32) {
    %c0_i32 = arith.constant 0 : i32
    %c0_i32_0 = arith.constant 0 : i32
    return %arg0, %c0_i32 : i32, i32
  }
  func.func @transform_1(%arg0: i32) -> (i32, i32) {
    %c0_i32 = arith.constant 0 : i32
    %c0_i32_0 = arith.constant 0 : i32
    %c0_i32_1 = arith.constant 0 : i32
    return %c0_i32, %c0_i32_0 : i32, i32
  }
  func.func @transform_2(%arg0: i32) -> (i32, i32) {
    %c0_i32 = arith.constant 0 : i32
    %c0_i32_0 = arith.constant 0 : i32
    %c0_i32_1 = arith.constant 0 : i32
    return %c0_i32, %c0_i32_0 : i32, i32
  }
  func.func @transform_3(%arg0: i32) -> (i32, i32) {
    %c0_i32 = arith.constant 0 : i32
    %c0_i32_0 = arith.constant 0 : i32
    return %arg0, %c0_i32 : i32, i32
  }
}

</mosaic_0001>

<llo_original>
// kernel: _lambda_.3
$region0: #{_lambda_.3}
  #allocation0 [shape = 'u32[]', space=smem, size = 0x4, offset = 0x4, fixed_abs, tag = 'smem constant byte address 0x4 - core index']
  #allocation1 [shape = 'u32[144,128]{1,0:T(1,128)}', space=vmem, size = 0x12000, scoped, tag = 'internal scratch']
  %s0 = inlined_call_operand.hbm [shape: f32[1024,256], index: 0, kind: input, shape index: {}]
  %s1 = inlined_call_operand.vmem [shape: bf16[256,512], index: 1, kind: input, shape index: {}]
  %s2 = inlined_call_operand.hbm [shape: f32[1,512], index: 2, kind: input, shape index: {}]
  %s3 = inlined_call_operand.vmem [shape: bf16[256,256], index: 3, kind: input, shape index: {}]
  %s4 = inlined_call_operand.hbm [shape: f32[1,256], index: 4, kind: input, shape index: {}]
  %s5 = inlined_call_operand.vmem [shape: bf16[256,256], index: 5, kind: input, shape index: {}]
  %s6 = inlined_call_operand.vmem [shape: f32[1024,512], index: 6, kind: output, shape index: {0}]
  %s7 = inlined_call_operand.vmem [shape: f32[1024,256], index: 7, kind: output, shape index: {1}]
  %8 = xla_tuple %s6, %s7
  %s9 = sld [smem:[#allocation0]]
  $region77: #{_lambda_.3} parent=0
    _
  %s11 = ssub.s32 1, %s9
  %s12 = scalar_select 0, %s11, %s9
  $region1: #{_lambda_.3} parent=0
    #allocation2 [shape = 'u8[262144]{0}', space=vmem, size = 0x40000, scoped, tag = 'input window, operand 0']
    #allocation3 [shape = 's32[2]{0}', space=sflag, size = 0x8, scoped, tag = 'scoped memory for _lambda_.3']
    #allocation4 [shape = 'u8[2048]{0}', space=vmem, size = 0x800, scoped, tag = 'input window, operand 2, single buffered']
    #allocation5 [shape = 's32[1]{0}', space=sflag, size = 0x4, scoped, tag = 'scoped memory for _lambda_.3']
    #allocation6 [shape = 'u8[1024]{0}', space=vmem, size = 0x400, scoped, tag = 'input window, operand 4, single buffered']
    %13 = vsyncpa [#allocation3], 0
    %s14 = scalar_lea.sflag [#allocation3], 1
    %15 = vsyncpa %s14, 0
    %16 = vsyncpa [#allocation5], 0
    loop: start=0, step=1, limit=10
    $region2: #{_lambda_.3} parent=1 // loop_pre_header
      _
    $region3: #{_lambda_.3} parent=1 // loop_header
      %s18 = sphi 0, %s22
      %p19 = scmp.ge.s32.totalorder %s18, 10
      %s28 = sphi 0, %s30
      %s31 = sphi 0, %s28
      %s32 = sphi 0, %s31
      %s48 = sphi 0, %s32
      %s52 = sphi 0, %s52
      %s54 = sphi 0, %s52
      %s55 = sphi 0, %s54
      %s69 = sphi 0, %s55
      %s73 = sphi 0, %s73
      %s75 = sphi 0, %s73
      %s76 = sphi 0, %s75
      %s90 = sphi 0, %s76
      %s94 = sphi 0, %s94
      %s96 = sphi 0, %s94
      %s97 = sphi 0, %s96
      %s111 = sphi 0, %s97
      %s115 = sphi 0, %s115
      %s117 = sphi 0, %s115
      %s118 = sphi 0, %s117
      %s132 = sphi 0, %s118
      %s136 = sphi 0, %s136
      %s138 = sphi 0, %s136
      %s139 = sphi 0, %s138
      %s153 = sphi 0, %s139
      %s159 = sphi 0, %s161
      %s162 = sphi 0, %s159
      %s163 = sphi 0, %s162
      %s179 = sphi 0, %s163
      %s185 = sphi 0, %s187
      %s188 = sphi 0, %s185
      %s189 = sphi 0, %s188
      %s205 = sphi 0, %s189
    $region4: #{_lambda_.3} parent=1 // loop_header_branch
      %21 = sbr.rel (%p19) target = $region8
    $region5: #{_lambda_.3} parent=1 // loop_body
      %s23 = ssub.s32 %s18, 1
      %s24 = ssub.s32 %s18, 2
      %s25 = sadd.s32 %s18, 1
      %s26 = ssub.s32 %s18, %s25
      %p27 = scmp.eq.s32.totalorder %s26, 0
      %s29 = sadd.s32 %s28, 1
      %s30 = scalar_select %p27, %s28, %s29
      %p33 = pneg %p27
      %p34 = scmp.eq.s32.totalorder %s18, 7
      %p35 = por %p33, %p34
      %p36 = scmp.ne.s32.totalorder %s28, %s31
      %p37 = scmp.eq.s32.totalorder %s18, 0
      %p38 = por %p36, %p37
      %p39 = scmp.ne.s32.totalorder %s28, %s31
      %p40 = scmp.eq.s32.totalorder %s23, 7
      %p41 = por %p39, %p40
      %p42 = scmp.ne.s32.totalorder %s31, %s32
      %p43 = scmp.eq.s32.totalorder %s23, 0
      %p44 = por %p42, %p43
      %p45 = scmp.ne.s32.totalorder %s31, %s32
      %p46 = scmp.eq.s32.totalorder %s24, 7
      %p47 = por %p45, %p46
      %p49 = scmp.ne.s32.totalorder %s32, %s48
      %p50 = scmp.eq.s32.totalorder %s24, 0
      %p51 = por %p49, %p50
      %s53 = sadd.s32 %s52, 1
      %p56 = scmp.eq.s32.totalorder %s18, 7
      %p57 = scmp.ne.s32.totalorder %s52, %s54
      %p58 = scmp.eq.s32.totalorder %s18, 0
      %p59 = por %p57, %p58
      %p60 = scmp.ne.s32.totalorder %s52, %s54
      %p61 = scmp.eq.s32.totalorder %s23, 7
      %p62 = por %p60, %p61
      %p63 = scmp.ne.s32.totalorder %s54, %s55
      %p64 = scmp.eq.s32.totalorder %s23, 0
      %p65 = por %p63, %p64
      %p66 = scmp.ne.s32.totalorder %s54, %s55
      %p67 = scmp.eq.s32.totalorder %s24, 7
      %p68 = por %p66, %p67
      %p70 = scmp.ne.s32.totalorder %s55, %s69
      %p71 = scmp.eq.s32.totalorder %s24, 0
      %p72 = por %p70, %p71
      %s74 = sadd.s32 %s73, 1
      %p77 = scmp.eq.s32.totalorder %s18, 7
      %p78 = scmp.ne.s32.totalorder %s73, %s75
      %p79 = scmp.eq.s32.totalorder %s18, 0
      %p80 = por %p78, %p79
      %p81 = scmp.ne.s32.totalorder %s73, %s75
      %p82 = scmp.eq.s32.totalorder %s23, 7
      %p83 = por %p81, %p82
      %p84 = scmp.ne.s32.totalorder %s75, %s76
      %p85 = scmp.eq.s32.totalorder %s23, 0
      %p86 = por %p84, %p85
      %p87 = scmp.ne.s32.totalorder %s75, %s76
      %p88 = scmp.eq.s32.totalorder %s24, 7
      %p89 = por %p87, %p88
      %p91 = scmp.ne.s32.totalorder %s76, %s90
      %p92 = scmp.eq.s32.totalorder %s24, 0
      %p93 = por %p91, %p92
      %s95 = sadd.s32 %s94, 1
      %p98 = scmp.eq.s32.totalorder %s18, 7
      %p99 = scmp.ne.s32.totalorder %s94, %s96
      %p100 = scmp.eq.s32.totalorder %s18, 0
      %p101 = por %p99, %p100
      %p102 = scmp.ne.s32.totalorder %s94, %s96
      %p103 = scmp.eq.s32.totalorder %s23, 7
      %p104 = por %p102, %p103
      %p105 = scmp.ne.s32.totalorder %s96, %s97
      %p106 = scmp.eq.s32.totalorder %s23, 0
      %p107 = por %p105, %p106
      %p108 = scmp.ne.s32.totalorder %s96, %s97
      %p109 = scmp.eq.s32.totalorder %s24, 7
      %p110 = por %p108, %p109
      %p112 = scmp.ne.s32.totalorder %s97, %s111
      %p113 = scmp.eq.s32.totalorder %s24, 0
      %p114 = por %p112, %p113
      %s116 = sadd.s32 %s115, 1
      %p119 = scmp.eq.s32.totalorder %s18, 7
      %p120 = scmp.ne.s32.totalorder %s115, %s117
      %p121 = scmp.eq.s32.totalorder %s18, 0
      %p122 = por %p120, %p121
      %p123 = scmp.ne.s32.totalorder %s115, %s117
      %p124 = scmp.eq.s32.totalorder %s23, 7
      %p125 = por %p123, %p124
      %p126 = scmp.ne.s32.totalorder %s117, %s118
      %p127 = scmp.eq.s32.totalorder %s23, 0
      %p128 = por %p126, %p127
      %p129 = scmp.ne.s32.totalorder %s117, %s118
      %p130 = scmp.eq.s32.totalorder %s24, 7
      %p131 = por %p129, %p130
      %p133 = scmp.ne.s32.totalorder %s118, %s132
      %p134 = scmp.eq.s32.totalorder %s24, 0
      %p135 = por %p133, %p134
      %s137 = sadd.s32 %s136, 1
      %p140 = scmp.eq.s32.totalorder %s18, 7
      %p141 = scmp.ne.s32.totalorder %s136, %s138
      %p142 = scmp.eq.s32.totalorder %s18, 0
      %p143 = por %p141, %p142
      %p144 = scmp.ne.s32.totalorder %s136, %s138
      %p145 = scmp.eq.s32.totalorder %s23, 7
      %p146 = por %p144, %p145
      %p147 = scmp.ne.s32.totalorder %s138, %s139
      %p148 = scmp.eq.s32.totalorder %s23, 0
      %p149 = por %p147, %p148
      %p150 = scmp.ne.s32.totalorder %s138, %s139
      %p151 = scmp.eq.s32.totalorder %s24, 7
      %p152 = por %p150, %p151
      %p154 = scmp.ne.s32.totalorder %s139, %s153
      %p155 = scmp.eq.s32.totalorder %s24, 0
      %p156 = por %p154, %p155
      %s157 = ssub.s32 %s18, %s25
      %p158 = scmp.eq.s32.totalorder %s157, 0
      %s160 = sadd.s32 %s159, 1
      %s161 = scalar_select %p158, %s159, %s160
      %p164 = pneg %p158
      %p165 = scmp.eq.s32.totalorder %s18, 7
      %p166 = por %p164, %p165
      %p167 = scmp.ne.s32.totalorder %s159, %s162
      %p168 = scmp.eq.s32.totalorder %s18, 0
      %p169 = por %p167, %p168
      %p170 = scmp.ne.s32.totalorder %s159, %s162
      %p171 = scmp.eq.s32.totalorder %s23, 7
      %p172 = por %p170, %p171
      %p173 = scmp.ne.s32.totalorder %s162, %s163
      %p174 = scmp.eq.s32.totalorder %s23, 0
      %p175 = por %p173, %p174
      %p176 = scmp.ne.s32.totalorder %s162, %s163
      %p177 = scmp.eq.s32.totalorder %s24, 7
      %p178 = por %p176, %p177
      %p180 = scmp.ne.s32.totalorder %s163, %s179
      %p181 = scmp.eq.s32.totalorder %s24, 0
      %p182 = por %p180, %p181
      %s183 = ssub.s32 %s18, %s25
      %p184 = scmp.eq.s32.totalorder %s183, 0
      %s186 = sadd.s32 %s185, 1
      %s187 = scalar_select %p184, %s185, %s186
      %p190 = pneg %p184
      %p191 = scmp.eq.s32.totalorder %s18, 7
      %p192 = por %p190, %p191
      %p193 = scmp.ne.s32.totalorder %s185, %s188
      %p194 = scmp.eq.s32.totalorder %s18, 0
      %p195 = por %p193, %p194
      %p196 = scmp.ne.s32.totalorder %s185, %s188
      %p197 = scmp.eq.s32.totalorder %s23, 7
      %p198 = por %p196, %p197
      %p199 = scmp.ne.s32.totalorder %s188, %s189
      %p200 = scmp.eq.s32.totalorder %s23, 0
      %p201 = por %p199, %p200
      %p202 = scmp.ne.s32.totalorder %s188, %s189
      %p203 = scmp.eq.s32.totalorder %s24, 7
      %p204 = por %p202, %p203
      %p206 = scmp.ne.s32.totalorder %s189, %s205
      %p207 = scmp.eq.s32.totalorder %s24, 0
      %p208 = por %p206, %p207
      %p209 = scmp.le.s32.totalorder 1, %s18
      %p210 = scmp.lt.s32.totalorder %s18, 9
      %p211 = pnand %p209, %p210
      %p212 = pneg %p211
      // Predicated region
      $region9: #{_lambda_.3} parent=5 // pred_check
        _
      $region10: #{_lambda_.3} parent=5 // pred_check_branch
        %214 = sbr.rel (%p211) target = $region12
      $region11: #{_lambda_.3} parent=5 // pred_region
        %s215 = ssub.s32 %s18, 1
        // Predicated region
        $region13: #{_lambda_.3} parent=11 // pred_check
          %p216 = pneg %p65
        $region14: #{_lambda_.3} parent=11 // pred_check_branch
          %218 = sbr.rel (%p216) target = $region16
        $region15: #{_lambda_.3} parent=11 // pred_region
          _
        $region16: #{_lambda_.3} parent=11 // pred_fallthru
          _
        // Predicated region
        $region17: #{_lambda_.3} parent=11 // pred_check
          %p219 = pneg %p86
        $region18: #{_lambda_.3} parent=11 // pred_check_branch
          %221 = sbr.rel (%p219) target = $region20
        $region19: #{_lambda_.3} parent=11 // pred_region
          %s223 = ssub.s32 64, 64
          %224 = vsyncadd [#allocation5], %s223
          %s226 = sshll.u32 [#allocation4], 4
          %s227 = int_to_ptr.vmem [resolvable:$true] %s226
          %229 = dma.hbm_to_vmem [thread:$0]  %s2, 64, %s227, [#allocation5]
        $region20: #{_lambda_.3} parent=11 // pred_fallthru
          _
        // Predicated region
        $region21: #{_lambda_.3} parent=11 // pred_check
          %p230 = pneg %p107
        $region22: #{_lambda_.3} parent=11 // pred_check_branch
          %232 = sbr.rel (%p230) target = $region24
        $region23: #{_lambda_.3} parent=11 // pred_region
          _
        $region24: #{_lambda_.3} parent=11 // pred_fallthru
          _
        // Predicated region
        $region25: #{_lambda_.3} parent=11 // pred_check
          %p233 = pneg %p128
        $region26: #{_lambda_.3} parent=11 // pred_check_branch
          %235 = sbr.rel (%p233) target = $region28
        $region27: #{_lambda_.3} parent=11 // pred_region
          %s237 = ssub.s32 32, 32
          %238 = vsyncadd [#allocation5], %s237
          %s240 = sshll.u32 [#allocation6], 4
          %s241 = int_to_ptr.vmem [resolvable:$true] %s240
          %243 = dma.hbm_to_vmem [thread:$0]  %s4, 32, %s241, [#allocation5]
        $region28: #{_lambda_.3} parent=11 // pred_fallthru
          _
        // Predicated region
        $region29: #{_lambda_.3} parent=11 // pred_check
          %p244 = pneg %p149
        $region30: #{_lambda_.3} parent=11 // pred_check_branch
          %246 = sbr.rel (%p244) target = $region32
        $region31: #{_lambda_.3} parent=11 // pred_region
          _
        $region32: #{_lambda_.3} parent=11 // pred_fallthru
          _
      $region12: #{_lambda_.3} parent=5 // pred_fallthru
        _
      %p247 = scmp.lt.s32.totalorder %s18, 8
      // Predicated region
      $region33: #{_lambda_.3} parent=5 // pred_check
        %p248 = pneg %p247
      $region34: #{_lambda_.3} parent=5 // pred_check_branch
        %250 = sbr.rel (%p248) target = $region36
      $region35: #{_lambda_.3} parent=5 // pred_region
        // Predicated region
        $region37: #{_lambda_.3} parent=35 // pred_check
          %p251 = pneg %p38
        $region38: #{_lambda_.3} parent=35 // pred_check_branch
          %253 = sbr.rel (%p251) target = $region40
        $region39: #{_lambda_.3} parent=35 // pred_region
          %s254 = sand.u32 %s28, 1
          %s255 = scalar_lea.sflag [#allocation3], %s254
          %s256 = sand.u32 %s28, 1
          %s257 = smul.addr %s256, 256
          %s258 = scalar_lea.vmem [#allocation2], %s257
          %s259 = smul.u32 16, %s18
          %s261 = ssub.s32 4096, 4096
          %262 = vsyncadd %s255, %s261
          %s263 = smul.addr %s259, 2
          %s264 = smul.addr %s263, 128
          %s265 = scalar_lea.hbm %s0, %s264
          %s266 = sshll.u32 %s258, 4
          %s267 = int_to_ptr.vmem [resolvable:$true] %s266
          %272 = dma.hbm_to_vmem [thread:$0]  %s265, 4096, %s267, %s255, 256, 256, 16
        $region40: #{_lambda_.3} parent=35 // pred_fallthru
          _
      $region36: #{_lambda_.3} parent=5 // pred_fallthru
        _
      %p273 = scmp.le.s32.totalorder 1, %s18
      %p274 = scmp.lt.s32.totalorder %s18, 9
      %p275 = pnand %p273, %p274
      %p276 = pneg %p275
      // Predicated region
      $region41: #{_lambda_.3} parent=5 // pred_check
        _
      $region42: #{_lambda_.3} parent=5 // pred_check_branch
        %278 = sbr.rel (%p275) target = $region44
      $region43: #{_lambda_.3} parent=5 // pred_region
        %s279 = ssub.s32 %s18, 1
        %s280 = sand.u32 %s31, 1
        %s281 = scalar_lea.sflag [#allocation3], %s280
        %s282 = sand.u32 %s31, 1
        %s283 = smul.addr %s282, 256
        %s284 = scalar_lea.vmem [#allocation2], %s283
        // Predicated region
        $region45: #{_lambda_.3} parent=43 // pred_check
          %p285 = pneg %p44
        $region46: #{_lambda_.3} parent=43 // pred_check_branch
          %287 = sbr.rel (%p285) target = $region48
        $region47: #{_lambda_.3} parent=43 // pred_region
          %288 = dma.done %s281, 4096
        $region48: #{_lambda_.3} parent=43 // pred_fallthru
          _
        // Predicated region
        $region49: #{_lambda_.3} parent=43 // pred_check
          %p289 = pneg %p86
        $region50: #{_lambda_.3} parent=43 // pred_check_branch
          %291 = sbr.rel (%p289) target = $region52
        $region51: #{_lambda_.3} parent=43 // pred_region
          %292 = dma.done [#allocation5], 64
        $region52: #{_lambda_.3} parent=43 // pred_fallthru
          _
        // Predicated region
        $region53: #{_lambda_.3} parent=43 // pred_check
          %p293 = pneg %p128
        $region54: #{_lambda_.3} parent=43 // pred_check_branch
          %295 = sbr.rel (%p293) target = $region56
        $region55: #{_lambda_.3} parent=43 // pred_region
          %296 = dma.done [#allocation5], 32
        $region56: #{_lambda_.3} parent=43 // pred_fallthru
          _
        %s297 = sand.u32 %s31, 1
        %s298 = scalar_lea.sflag [#allocation3], %s297
        %s299 = sand.u32 %s31, 1
        %s300 = smul.addr %s299, 256
        %s301 = scalar_lea.vmem [#allocation2], %s300
        %p302 = pneg %p44
        %p303 = pneg %p41
        %p304 = pneg %p65
        %p305 = pneg %p62
        %p306 = pneg %p86
        %p307 = pneg %p83
        %p308 = pneg %p107
        %p309 = pneg %p104
        %p310 = pneg %p128
        %p311 = pneg %p125
        %p312 = pneg %p149
        %p313 = pneg %p146
        %p314 = pneg %p175
        %p315 = pneg %p172
        %s316 = smul.u32 16, %s23
        %p317 = scmp.lt.s32.totalorder %s316, 127
        %s318 = scalar_select %p317, %s316, 127
        %s319 = smul.addr %s318, 4
        %s320 = smul.addr %s319, 8
        %s321 = scalar_lea.vmem %s6, %s320
        %p322 = pneg %p201
        %p323 = pneg %p198
        %s324 = smul.u32 16, %s23
        %p325 = scmp.lt.s32.totalorder %s324, 127
        %s326 = scalar_select %p325, %s324, 127
        %s327 = smul.addr %s326, 2
        %s328 = smul.addr %s327, 8
        %s329 = scalar_lea.vmem %s7, %s328
        %s330 = smul.u32 16, %s23
        %s331 = smul.u32 16, %s23
        %p332 = scmp.lt.s32.totalorder %s331, 127
        %s333 = scalar_select %p332, %s331, 127
        %s334 = smul.addr %s333, 4
        %s335 = smul.addr %s334, 8
        %s336 = scalar_lea.vmem %s6, %s335
        %s337 = smul.u32 16, %s23
        %s338 = smul.u32 16, %s23
        %p339 = scmp.lt.s32.totalorder %s338, 127
        %s340 = scalar_select %p339, %s338, 127
        %s341 = smul.addr %s340, 2
        %s342 = smul.addr %s341, 8
        %s343 = scalar_lea.vmem %s7, %s342
        %s344 = smul.u32 16, %s23
        %v345 = vld [vmem:[%s284] sm:$0xff]
        %v346 = vld [vmem:[%s284 + $0x8] sm:$0xff]
        %v347 = vld [vmem:[%s284 + $0x10] sm:$0xff]
        %v348 = vld [vmem:[%s284 + $0x18] sm:$0xff]
        %v349 = vld [vmem:[%s284 + $0x20] sm:$0xff]
        %v350 = vld [vmem:[%s284 + $0x28] sm:$0xff]
        %v351 = vld [vmem:[%s284 + $0x30] sm:$0xff]
        %v352 = vld [vmem:[%s284 + $0x38] sm:$0xff]
        %v353 = vld [vmem:[%s284 + $0x40] sm:$0xff]
        %v354 = vld [vmem:[%s284 + $0x48] sm:$0xff]
        %v355 = vld [vmem:[%s284 + $0x50] sm:$0xff]
        %v356 = vld [vmem:[%s284 + $0x58] sm:$0xff]
        %v357 = vld [vmem:[%s284 + $0x60] sm:$0xff]
        %v358 = vld [vmem:[%s284 + $0x68] sm:$0xff]
        %v359 = vld [vmem:[%s284 + $0x70] sm:$0xff]
        %v360 = vld [vmem:[%s284 + $0x78] sm:$0xff]
        %v361 = vld [vmem:[%s284 + $0x80] sm:$0xff]
        %v362 = vld [vmem:[%s284 + $0x88] sm:$0xff]
        %v363 = vld [vmem:[%s284 + $0x90] sm:$0xff]
        %v364 = vld [vmem:[%s284 + $0x98] sm:$0xff]
        %v365 = vld [vmem:[%s284 + $0xa0] sm:$0xff]
        %v366 = vld [vmem:[%s284 + $0xa8] sm:$0xff]
        %v367 = vld [vmem:[%s284 + $0xb0] sm:$0xff]
        %v368 = vld [vmem:[%s284 + $0xb8] sm:$0xff]
        %v369 = vld [vmem:[%s284 + $0xc0] sm:$0xff]
        %v370 = vld [vmem:[%s284 + $0xc8] sm:$0xff]
        %v371 = vld [vmem:[%s284 + $0xd0] sm:$0xff]
        %v372 = vld [vmem:[%s284 + $0xd8] sm:$0xff]
        %v373 = vld [vmem:[%s284 + $0xe0] sm:$0xff]
        %v374 = vld [vmem:[%s284 + $0xe8] sm:$0xff]
        %v375 = vld [vmem:[%s284 + $0xf0] sm:$0xff]
        %v376 = vld [vmem:[%s284 + $0xf8] sm:$0xff]
        %v377 = vpack.c.bf16 %v347, %v345
        %v378 = vpack.c.bf16 %v348, %v346
        %v379 = vpack.c.bf16 %v351, %v349
        %v380 = vpack.c.bf16 %v352, %v350
        %v381 = vpack.c.bf16 %v355, %v353
        %v382 = vpack.c.bf16 %v356, %v354
        %v383 = vpack.c.bf16 %v359, %v357
        %v384 = vpack.c.bf16 %v360, %v358
        %v385 = vpack.c.bf16 %v363, %v361
        %v386 = vpack.c.bf16 %v364, %v362
        %v387 = vpack.c.bf16 %v367, %v365
        %v388 = vpack.c.bf16 %v368, %v366
        %v389 = vpack.c.bf16 %v371, %v369
        %v390 = vpack.c.bf16 %v372, %v370
        %v391 = vpack.c.bf16 %v375, %v373
        %v392 = vpack.c.bf16 %v376, %v374
        %v393 = vld [vmem:[%s1] sm:$0xff]
        %v394 = vld [vmem:[%s1 + $0x8] sm:$0xff]
        %v395 = vld [vmem:[%s1 + $0x10] sm:$0xff]
        %v396 = vld [vmem:[%s1 + $0x18] sm:$0xff]
        %v397 = vld [vmem:[%s1 + $0x20] sm:$0xff]
        %v398 = vld [vmem:[%s1 + $0x28] sm:$0xff]
        %v399 = vld [vmem:[%s1 + $0x30] sm:$0xff]
        %v400 = vld [vmem:[%s1 + $0x38] sm:$0xff]
        %v401 = vld [vmem:[%s1 + $0x40] sm:$0xff]
        %v402 = vld [vmem:[%s1 + $0x48] sm:$0xff]
        %v403 = vld [vmem:[%s1 + $0x50] sm:$0xff]
        %v404 = vld [vmem:[%s1 + $0x58] sm:$0xff]
        %v405 = vld [vmem:[%s1 + $0x60] sm:$0xff]
        %v406 = vld [vmem:[%s1 + $0x68] sm:$0xff]
        %v407 = vld [vmem:[%s1 + $0x70] sm:$0xff]
        %v408 = vld [vmem:[%s1 + $0x78] sm:$0xff]
        %v409 = vld [vmem:[%s1 + $0x80] sm:$0xff]
        %v410 = vld [vmem:[%s1 + $0x88] sm:$0xff]
        %v411 = vld [vmem:[%s1 + $0x90] sm:$0xff]
        %v412 = vld [vmem:[%s1 + $0x98] sm:$0xff]
        %v413 = vld [vmem:[%s1 + $0xa0] sm:$0xff]
        %v414 = vld [vmem:[%s1 + $0xa8] sm:$0xff]
        %v415 = vld [vmem:[%s1 + $0xb0] sm:$0xff]
        %v416 = vld [vmem:[%s1 + $0xb8] sm:$0xff]
        %v417 = vld [vmem:[%s1 + $0xc0] sm:$0xff]
        %v418 = vld [vmem:[%s1 + $0xc8] sm:$0xff]
        %v419 = vld [vmem:[%s1 + $0xd0] sm:$0xff]
        %v420 = vld [vmem:[%s1 + $0xd8] sm:$0xff]
        %v421 = vld [vmem:[%s1 + $0xe0] sm:$0xff]
        %v422 = vld [vmem:[%s1 + $0xe8] sm:$0xff]
        %v423 = vld [vmem:[%s1 + $0xf0] sm:$0xff]
        %v424 = vld [vmem:[%s1 + $0xf8] sm:$0xff]
        %v425 = vld [vmem:[%s1 + $0x100] sm:$0xff]
        %v426 = vld [vmem:[%s1 + $0x108] sm:$0xff]
        %v427 = vld [vmem:[%s1 + $0x110] sm:$0xff]
        %v428 = vld [vmem:[%s1 + $0x118] sm:$0xff]
        %v429 = vld [vmem:[%s1 + $0x120] sm:$0xff]
        %v430 = vld [vmem:[%s1 + $0x128] sm:$0xff]
        %v431 = vld [vmem:[%s1 + $0x130] sm:$0xff]
        %v432 = vld [vmem:[%s1 + $0x138] sm:$0xff]
        %v433 = vld [vmem:[%s1 + $0x140] sm:$0xff]
        %v434 = vld [vmem:[%s1 + $0x148] sm:$0xff]
        %v435 = vld [vmem:[%s1 + $0x150] sm:$0xff]
        %v436 = vld [vmem:[%s1 + $0x158] sm:$0xff]
        %v437 = vld [vmem:[%s1 + $0x160] sm:$0xff]
        %v438 = vld [vmem:[%s1 + $0x168] sm:$0xff]
        %v439 = vld [vmem:[%s1 + $0x170] sm:$0xff]
        %v440 = vld [vmem:[%s1 + $0x178] sm:$0xff]
        %v441 = vld [vmem:[%s1 + $0x180] sm:$0xff]
        %v442 = vld [vmem:[%s1 + $0x188] sm:$0xff]
        %v443 = vld [vmem:[%s1 + $0x190] sm:$0xff]
        %v444 = vld [vmem:[%s1 + $0x198] sm:$0xff]
        %v445 = vld [vmem:[%s1 + $0x1a0] sm:$0xff]
        %v446 = vld [vmem:[%s1 + $0x1a8] sm:$0xff]
        %v447 = vld [vmem:[%s1 + $0x1b0] sm:$0xff]
        %v448 = vld [vmem:[%s1 + $0x1b8] sm:$0xff]
        %v449 = vld [vmem:[%s1 + $0x1c0] sm:$0xff]
        %v450 = vld [vmem:[%s1 + $0x1c8] sm:$0xff]
        %v451 = vld [vmem:[%s1 + $0x1d0] sm:$0xff]
        %v452 = vld [vmem:[%s1 + $0x1d8] sm:$0xff]
        %v453 = vld [vmem:[%s1 + $0x1e0] sm:$0xff]
        %v454 = vld [vmem:[%s1 + $0x1e8] sm:$0xff]
        %v455 = vld [vmem:[%s1 + $0x1f0] sm:$0xff]
        %v456 = vld [vmem:[%s1 + $0x1f8] sm:$0xff]
        %v457 = vld [vmem:[#allocation4] sm:$0xf]
        %v459 = vlaneseq
        %v460 = vshrl.u32 %v459, 7
        %v461 = vsub.s32 0, %v460
        %v462 = vrot.slane %v457, %v461
        %v463 = vlaneseq
        %v464 = vshrl.u32 %v463, 7
        %v465 = vsub.s32 1, %v464
        %v466 = vrot.slane %v457, %v465
        %v467 = vlaneseq
        %v468 = vshrl.u32 %v467, 7
        %v469 = vsub.s32 2, %v468
        %v470 = vrot.slane %v457, %v469
        %v471 = vlaneseq
        %v472 = vshrl.u32 %v471, 7
        %v473 = vsub.s32 3, %v472
        %v474 = vrot.slane %v457, %v473
        %v543 = vunpack.c.l.b16 %v393
        %v544 = vunpack.c.h.b16 %v393
        %v545 = vunpack.c.l.b16 %v394
        %v546 = vunpack.c.h.b16 %v394
        %v547 = vunpack.c.l.b16 %v395
        %v548 = vunpack.c.h.b16 %v395
        %v549 = vunpack.c.l.b16 %v396
        %v550 = vunpack.c.h.b16 %v396
        %v551 = vunpack.c.l.b16 %v397
        %v552 = vunpack.c.h.b16 %v397
        %v553 = vunpack.c.l.b16 %v398
        %v554 = vunpack.c.h.b16 %v398
        %v555 = vunpack.c.l.b16 %v399
        %v556 = vunpack.c.h.b16 %v399
        %v557 = vunpack.c.l.b16 %v400
        %v558 = vunpack.c.h.b16 %v400
        %v559 = vunpack.c.l.b16 %v401
        %v560 = vunpack.c.h.b16 %v401
        %v561 = vunpack.c.l.b16 %v402
        %v562 = vunpack.c.h.b16 %v402
        %v563 = vunpack.c.l.b16 %v403
        %v564 = vunpack.c.h.b16 %v403
        %v565 = vunpack.c.l.b16 %v404
        %v566 = vunpack.c.h.b16 %v404
        %v567 = vunpack.c.l.b16 %v405
        %v568 = vunpack.c.h.b16 %v405
        %v569 = vunpack.c.l.b16 %v406
        %v570 = vunpack.c.h.b16 %v406
        %v571 = vunpack.c.l.b16 %v407
        %v572 = vunpack.c.h.b16 %v407
        %v573 = vunpack.c.l.b16 %v408
        %v574 = vunpack.c.h.b16 %v408
        %v575 = vunpack.c.l.b16 %v409
        %v576 = vunpack.c.h.b16 %v409
        %v577 = vunpack.c.l.b16 %v410
        %v578 = vunpack.c.h.b16 %v410
        %v579 = vunpack.c.l.b16 %v411
        %v580 = vunpack.c.h.b16 %v411
        %v581 = vunpack.c.l.b16 %v412
        %v582 = vunpack.c.h.b16 %v412
        %v583 = vunpack.c.l.b16 %v413
        %v584 = vunpack.c.h.b16 %v413
        %v585 = vunpack.c.l.b16 %v414
        %v586 = vunpack.c.h.b16 %v414
        %v587 = vunpack.c.l.b16 %v415
        %v588 = vunpack.c.h.b16 %v415
        %v589 = vunpack.c.l.b16 %v416
        %v590 = vunpack.c.h.b16 %v416
        %v591 = vunpack.c.l.b16 %v417
        %v592 = vunpack.c.h.b16 %v417
        %v593 = vunpack.c.l.b16 %v418
        %v594 = vunpack.c.h.b16 %v418
        %v595 = vunpack.c.l.b16 %v419
        %v596 = vunpack.c.h.b16 %v419
        %v597 = vunpack.c.l.b16 %v420
        %v598 = vunpack.c.h.b16 %v420
        %v599 = vunpack.c.l.b16 %v421
        %v600 = vunpack.c.h.b16 %v421
        %v601 = vunpack.c.l.b16 %v422
        %v602 = vunpack.c.h.b16 %v422
        %v603 = vunpack.c.l.b16 %v423
        %v604 = vunpack.c.h.b16 %v423
        %v605 = vunpack.c.l.b16 %v424
        %v606 = vunpack.c.h.b16 %v424
        %v607 = vunpack.c.l.b16 %v425
        %v608 = vunpack.c.h.b16 %v425
        %v609 = vunpack.c.l.b16 %v426
        %v610 = vunpack.c.h.b16 %v426
        %v611 = vunpack.c.l.b16 %v427
        %v612 = vunpack.c.h.b16 %v427
        %v613 = vunpack.c.l.b16 %v428
        %v614 = vunpack.c.h.b16 %v428
        %v615 = vunpack.c.l.b16 %v429
        %v616 = vunpack.c.h.b16 %v429
        %v617 = vunpack.c.l.b16 %v430
        %v618 = vunpack.c.h.b16 %v430
        %v619 = vunpack.c.l.b16 %v431
        %v620 = vunpack.c.h.b16 %v431
        %v621 = vunpack.c.l.b16 %v432
        %v622 = vunpack.c.h.b16 %v432
        %v623 = vunpack.c.l.b16 %v433
        %v624 = vunpack.c.h.b16 %v433
        %v625 = vunpack.c.l.b16 %v434
        %v626 = vunpack.c.h.b16 %v434
        %v627 = vunpack.c.l.b16 %v435
        %v628 = vunpack.c.h.b16 %v435
        %v629 = vunpack.c.l.b16 %v436
        %v630 = vunpack.c.h.b16 %v436
        %v631 = vunpack.c.l.b16 %v437
        %v632 = vunpack.c.h.b16 %v437
        %v633 = vunpack.c.l.b16 %v438
        %v634 = vunpack.c.h.b16 %v438
        %v635 = vunpack.c.l.b16 %v439
        %v636 = vunpack.c.h.b16 %v439
        %v637 = vunpack.c.l.b16 %v440
        %v638 = vunpack.c.h.b16 %v440
        %v639 = vunpack.c.l.b16 %v441
        %v640 = vunpack.c.h.b16 %v441
        %v641 = vunpack.c.l.b16 %v442
        %v642 = vunpack.c.h.b16 %v442
        %v643 = vunpack.c.l.b16 %v443
        %v644 = vunpack.c.h.b16 %v443
        %v645 = vunpack.c.l.b16 %v444
        %v646 = vunpack.c.h.b16 %v444
        %v647 = vunpack.c.l.b16 %v445
        %v648 = vunpack.c.h.b16 %v445
        %v649 = vunpack.c.l.b16 %v446
        %v650 = vunpack.c.h.b16 %v446
        %v651 = vunpack.c.l.b16 %v447
        %v652 = vunpack.c.h.b16 %v447
        %v653 = vunpack.c.l.b16 %v448
        %v654 = vunpack.c.h.b16 %v448
        %v655 = vunpack.c.l.b16 %v449
        %v656 = vunpack.c.h.b16 %v449
        %v657 = vunpack.c.l.b16 %v450
        %v658 = vunpack.c.h.b16 %v450
        %v659 = vunpack.c.l.b16 %v451
        %v660 = vunpack.c.h.b16 %v451
        %v661 = vunpack.c.l.b16 %v452
        %v662 = vunpack.c.h.b16 %v452
        %v663 = vunpack.c.l.b16 %v453
        %v664 = vunpack.c.h.b16 %v453
        %v665 = vunpack.c.l.b16 %v454
        %v666 = vunpack.c.h.b16 %v454
        %v667 = vunpack.c.l.b16 %v455
        %v668 = vunpack.c.h.b16 %v455
        %v669 = vunpack.c.l.b16 %v456
        %v670 = vunpack.c.h.b16 %v456
        %v671 = vpack.c.b16 %v547, %v543
        %v672 = vpack.c.b16 %v548, %v544
        %v673 = vpack.c.b16 %v549, %v545
        %v674 = vpack.c.b16 %v550, %v546
        %v675 = vpack.c.b16 %v555, %v551
        %v676 = vpack.c.b16 %v556, %v552
        %v677 = vpack.c.b16 %v557, %v553
        %v678 = vpack.c.b16 %v558, %v554
        %v679 = vpack.c.b16 %v563, %v559
        %v680 = vpack.c.b16 %v564, %v560
        %v681 = vpack.c.b16 %v565, %v561
        %v682 = vpack.c.b16 %v566, %v562
        %v683 = vpack.c.b16 %v571, %v567
        %v684 = vpack.c.b16 %v572, %v568
        %v685 = vpack.c.b16 %v573, %v569
        %v686 = vpack.c.b16 %v574, %v570
        %v687 = vpack.c.b16 %v579, %v575
        %v688 = vpack.c.b16 %v580, %v576
        %v689 = vpack.c.b16 %v581, %v577
        %v690 = vpack.c.b16 %v582, %v578
        %v691 = vpack.c.b16 %v587, %v583
        %v692 = vpack.c.b16 %v588, %v584
        %v693 = vpack.c.b16 %v589, %v585
        %v694 = vpack.c.b16 %v590, %v586
        %v695 = vpack.c.b16 %v595, %v591
        %v696 = vpack.c.b16 %v596, %v592
        %v697 = vpack.c.b16 %v597, %v593
        %v698 = vpack.c.b16 %v598, %v594
        %v699 = vpack.c.b16 %v603, %v599
        %v700 = vpack.c.b16 %v604, %v600
        %v701 = vpack.c.b16 %v605, %v601
        %v702 = vpack.c.b16 %v606, %v602
        %v703 = vpack.c.b16 %v611, %v607
        %v704 = vpack.c.b16 %v612, %v608
        %v705 = vpack.c.b16 %v613, %v609
        %v706 = vpack.c.b16 %v614, %v610
        %v707 = vpack.c.b16 %v619, %v615
        %v708 = vpack.c.b16 %v620, %v616
        %v709 = vpack.c.b16 %v621, %v617
        %v710 = vpack.c.b16 %v622, %v618
        %v711 = vpack.c.b16 %v627, %v623
        %v712 = vpack.c.b16 %v628, %v624
        %v713 = vpack.c.b16 %v629, %v625
        %v714 = vpack.c.b16 %v630, %v626
        %v715 = vpack.c.b16 %v635, %v631
        %v716 = vpack.c.b16 %v636, %v632
        %v717 = vpack.c.b16 %v637, %v633
        %v718 = vpack.c.b16 %v638, %v634
        %v719 = vpack.c.b16 %v643, %v639
        %v720 = vpack.c.b16 %v644, %v640
        %v721 = vpack.c.b16 %v645, %v641
        %v722 = vpack.c.b16 %v646, %v642
        %v723 = vpack.c.b16 %v651, %v647
        %v724 = vpack.c.b16 %v652, %v648
        %v725 = vpack.c.b16 %v653, %v649
        %v726 = vpack.c.b16 %v654, %v650
        %v727 = vpack.c.b16 %v659, %v655
        %v728 = vpack.c.b16 %v660, %v656
        %v729 = vpack.c.b16 %v661, %v657
        %v730 = vpack.c.b16 %v662, %v658
        %v731 = vpack.c.b16 %v667, %v663
        %v732 = vpack.c.b16 %v668, %v664
        %v733 = vpack.c.b16 %v669, %v665
        %v734 = vpack.c.b16 %v670, %v666
        %799 = vmatprep.subr.bf16.mxu0 %v672
        %800 = vmatpush1.bf16.msra.mxu0 %v671
        %801 = vmatprep.subr.bf16.mxu0 %v676
        %802 = vmatpush1.bf16.msra.mxu0 %v675
        %803 = vmatprep.subr.bf16.mxu0 %v680
        %804 = vmatpush1.bf16.msra.mxu0 %v679
        %805 = vmatprep.subr.bf16.mxu0 %v684
        %806 = vmatpush1.bf16.msra.mxu0 %v683
        %807 = vmatprep.subr.bf16.mxu0 %v688
        %808 = vmatpush1.bf16.msra.mxu0 %v687
        %809 = vmatprep.subr.bf16.mxu0 %v692
        %810 = vmatpush1.bf16.msra.mxu0 %v691
        %811 = vmatprep.subr.bf16.mxu0 %v696
        %812 = vmatpush1.bf16.msra.mxu0 %v695
        %813 = vmatprep.subr.bf16.mxu0 %v700
        %814 = vmatpush1.bf16.msra.mxu0 %v699
        %815 = vmatprep.subr.bf16.mxu0 %v704
        %816 = vmatpush1.bf16.msra.mxu0 %v703
        %817 = vmatprep.subr.bf16.mxu0 %v708
        %818 = vmatpush1.bf16.msra.mxu0 %v707
        %819 = vmatprep.subr.bf16.mxu0 %v712
        %820 = vmatpush1.bf16.msra.mxu0 %v711
        %821 = vmatprep.subr.bf16.mxu0 %v716
        %822 = vmatpush1.bf16.msra.mxu0 %v715
        %823 = vmatprep.subr.bf16.mxu0 %v720
        %824 = vmatpush1.bf16.msra.mxu0 %v719
        %825 = vmatprep.subr.bf16.mxu0 %v724
        %826 = vmatpush1.bf16.msra.mxu0 %v723
        %827 = vmatprep.subr.bf16.mxu0 %v728
        %828 = vmatpush1.bf16.msra.mxu0 %v727
        %829 = vmatprep.subr.bf16.mxu0 %v732
        %830 = vmatpush1.bf16.msra.mxu0 %v731
        %831 = vmatprep.mubr.bf16.mxu0 %v378
        %832 = vmatmul.mubr.bf16.gmra.mrb[0].mxu0 %v377
        %v833 = vpop.f32.mrb[0].mxu0
        %v834 = vadd.f32 %v462, %v833
        %v835 = vpop.f32.mrb[0].mxu0
        %v836 = vadd.f32 %v466, %v835
        %v837 = vpop.f32.mrb[0].mxu0
        %v838 = vadd.f32 %v462, %v837
        %v839 = vpop.f32.mrb[0].mxu0
        %v840 = vadd.f32 %v466, %v839
        %841 = vmatprep.mubr.bf16.mxu0 %v380
        %842 = vmatmul.mubr.bf16.gmra.mrb[0].mxu0 %v379
        %v843 = vpop.f32.mrb[0].mxu0
        %v844 = vadd.f32 %v462, %v843
        %v845 = vpop.f32.mrb[0].mxu0
        %v846 = vadd.f32 %v466, %v845
        %v847 = vpop.f32.mrb[0].mxu0
        %v848 = vadd.f32 %v462, %v847
        %v849 = vpop.f32.mrb[0].mxu0
        %v850 = vadd.f32 %v466, %v849
        %851 = vmatprep.mubr.bf16.mxu0 %v382
        %852 = vmatmul.mubr.bf16.gmra.mrb[0].mxu0 %v381
        %v853 = vpop.f32.mrb[0].mxu0
        %v854 = vadd.f32 %v462, %v853
        %v855 = vpop.f32.mrb[0].mxu0
        %v856 = vadd.f32 %v466, %v855
        %v857 = vpop.f32.mrb[0].mxu0
        %v858 = vadd.f32 %v462, %v857
        %v859 = vpop.f32.mrb[0].mxu0
        %v860 = vadd.f32 %v466, %v859
        %861 = vmatprep.mubr.bf16.mxu0 %v384
        %862 = vmatmul.mubr.bf16.gmra.mrb[0].mxu0 %v383
        %v863 = vpop.f32.mrb[0].mxu0
        %v864 = vadd.f32 %v462, %v863
        %v865 = vpop.f32.mrb[0].mxu0
        %v866 = vadd.f32 %v466, %v865
        %v867 = vpop.f32.mrb[0].mxu0
        %v868 = vadd.f32 %v462, %v867
        %v869 = vpop.f32.mrb[0].mxu0
        %v870 = vadd.f32 %v466, %v869
        %871 = vmatprep.mubr.bf16.mxu0 %v386
        %872 = vmatmul.mubr.bf16.gmra.mrb[0].mxu0 %v385
        %v873 = vpop.f32.mrb[0].mxu0
        %v874 = vadd.f32 %v462, %v873
        %v875 = vpop.f32.mrb[0].mxu0
        %v876 = vadd.f32 %v466, %v875
        %v877 = vpop.f32.mrb[0].mxu0
        %v878 = vadd.f32 %v462, %v877
        %v879 = vpop.f32.mrb[0].mxu0
        %v880 = vadd.f32 %v466, %v879
        %881 = vmatprep.mubr.bf16.mxu0 %v388
        %882 = vmatmul.mubr.bf16.gmra.mrb[0].mxu0 %v387
        %v883 = vpop.f32.mrb[0].mxu0
        %v884 = vadd.f32 %v462, %v883
        %v885 = vpop.f32.mrb[0].mxu0
        %v886 = vadd.f32 %v466, %v885
        %v887 = vpop.f32.mrb[0].mxu0
        %v888 = vadd.f32 %v462, %v887
        %v889 = vpop.f32.mrb[0].mxu0
        %v890 = vadd.f32 %v466, %v889
        %891 = vmatprep.mubr.bf16.mxu0 %v390
        %892 = vmatmul.mubr.bf16.gmra.mrb[0].mxu0 %v389
        %v893 = vpop.f32.mrb[0].mxu0
        %v894 = vadd.f32 %v462, %v893
        %v895 = vpop.f32.mrb[0].mxu0
        %v896 = vadd.f32 %v466, %v895
        %v897 = vpop.f32.mrb[0].mxu0
        %v898 = vadd.f32 %v462, %v897
        %v899 = vpop.f32.mrb[0].mxu0
        %v900 = vadd.f32 %v466, %v899
        %901 = vmatprep.mubr.bf16.mxu0 %v392
        %902 = vmatmul.mubr.bf16.gmra.mrb[0].mxu0 %v391
        %v903 = vpop.f32.mrb[0].mxu0
        %v904 = vadd.f32 %v462, %v903
        %v905 = vpop.f32.mrb[0].mxu0
        %v906 = vadd.f32 %v466, %v905
        %v907 = vpop.f32.mrb[0].mxu0
        %v908 = vadd.f32 %v462, %v907
        %v909 = vpop.f32.mrb[0].mxu0
        %v910 = vadd.f32 %v466, %v909
        %911 = vdwg.mxu0
        %912 = vmatprep.subr.bf16.mxu0 %v674
        %913 = vmatpush1.bf16.msra.mxu0 %v673
        %914 = vmatprep.subr.bf16.mxu0 %v678
        %915 = vmatpush1.bf16.msra.mxu0 %v677
        %916 = vmatprep.subr.bf16.mxu0 %v682
        %917 = vmatpush1.bf16.msra.mxu0 %v681
        %918 = vmatprep.subr.bf16.mxu0 %v686
        %919 = vmatpush1.bf16.msra.mxu0 %v685
        %920 = vmatprep.subr.bf16.mxu0 %v690
        %921 = vmatpush1.bf16.msra.mxu0 %v689
        %922 = vmatprep.subr.bf16.mxu0 %v694
        %923 = vmatpush1.bf16.msra.mxu0 %v693
        %924 = vmatprep.subr.bf16.mxu0 %v698
        %925 = vmatpush1.bf16.msra.mxu0 %v697
        %926 = vmatprep.subr.bf16.mxu0 %v702
        %927 = vmatpush1.bf16.msra.mxu0 %v701
        %928 = vmatprep.subr.bf16.mxu0 %v706
        %929 = vmatpush1.bf16.msra.mxu0 %v705
        %930 = vmatprep.subr.bf16.mxu0 %v710
        %931 = vmatpush1.bf16.msra.mxu0 %v709
        %932 = vmatprep.subr.bf16.mxu0 %v714
        %933 = vmatpush1.bf16.msra.mxu0 %v713
        %934 = vmatprep.subr.bf16.mxu0 %v718
        %935 = vmatpush1.bf16.msra.mxu0 %v717
        %936 = vmatprep.subr.bf16.mxu0 %v722
        %937 = vmatpush1.bf16.msra.mxu0 %v721
        %938 = vmatprep.subr.bf16.mxu0 %v726
        %939 = vmatpush1.bf16.msra.mxu0 %v725
        %940 = vmatprep.subr.bf16.mxu0 %v730
        %941 = vmatpush1.bf16.msra.mxu0 %v729
        %942 = vmatprep.subr.bf16.mxu0 %v734
        %943 = vmatpush1.bf16.msra.mxu0 %v733
        %944 = vmatprep.mubr.bf16.mxu0 %v378
        %945 = vmatmul.mubr.bf16.gmra.mrb[0].mxu0 %v377
        %v946 = vpop.f32.mrb[0].mxu0
        %v947 = vadd.f32 %v470, %v946
        %v948 = vpop.f32.mrb[0].mxu0
        %v949 = vadd.f32 %v474, %v948
        %v950 = vpop.f32.mrb[0].mxu0
        %v951 = vadd.f32 %v470, %v950
        %v952 = vpop.f32.mrb[0].mxu0
        %v953 = vadd.f32 %v474, %v952
        %954 = vmatprep.mubr.bf16.mxu0 %v380
        %955 = vmatmul.mubr.bf16.gmra.mrb[0].mxu0 %v379
        %v956 = vpop.f32.mrb[0].mxu0
        %v957 = vadd.f32 %v470, %v956
        %v958 = vpop.f32.mrb[0].mxu0
        %v959 = vadd.f32 %v474, %v958
        %v960 = vpop.f32.mrb[0].mxu0
        %v961 = vadd.f32 %v470, %v960
        %v962 = vpop.f32.mrb[0].mxu0
        %v963 = vadd.f32 %v474, %v962
        %964 = vmatprep.mubr.bf16.mxu0 %v382
        %965 = vmatmul.mubr.bf16.gmra.mrb[0].mxu0 %v381
        %v966 = vpop.f32.mrb[0].mxu0
        %v967 = vadd.f32 %v470, %v966
        %v968 = vpop.f32.mrb[0].mxu0
        %v969 = vadd.f32 %v474, %v968
        %v970 = vpop.f32.mrb[0].mxu0
        %v971 = vadd.f32 %v470, %v970
        %v972 = vpop.f32.mrb[0].mxu0
        %v973 = vadd.f32 %v474, %v972
        %974 = vmatprep.mubr.bf16.mxu0 %v384
        %975 = vmatmul.mubr.bf16.gmra.mrb[0].mxu0 %v383
        %v976 = vpop.f32.mrb[0].mxu0
        %v977 = vadd.f32 %v470, %v976
        %v978 = vpop.f32.mrb[0].mxu0
        %v979 = vadd.f32 %v474, %v978
        %v980 = vpop.f32.mrb[0].mxu0
        %v981 = vadd.f32 %v470, %v980
        %v982 = vpop.f32.mrb[0].mxu0
        %v983 = vadd.f32 %v474, %v982
        %984 = vmatprep.mubr.bf16.mxu0 %v386
        %985 = vmatmul.mubr.bf16.gmra.mrb[0].mxu0 %v385
        %v986 = vpop.f32.mrb[0].mxu0
        %v987 = vadd.f32 %v470, %v986
        %v988 = vpop.f32.mrb[0].mxu0
        %v989 = vadd.f32 %v474, %v988
        %v990 = vpop.f32.mrb[0].mxu0
        %v991 = vadd.f32 %v470, %v990
        %v992 = vpop.f32.mrb[0].mxu0
        %v993 = vadd.f32 %v474, %v992
        %994 = vmatprep.mubr.bf16.mxu0 %v388
        %995 = vmatmul.mubr.bf16.gmra.mrb[0].mxu0 %v387
        %v996 = vpop.f32.mrb[0].mxu0
        %v997 = vadd.f32 %v470, %v996
        %v998 = vpop.f32.mrb[0].mxu0
        %v999 = vadd.f32 %v474, %v998
        %v1000 = vpop.f32.mrb[0].mxu0
        %v1001 = vadd.f32 %v470, %v1000
        %v1002 = vpop.f32.mrb[0].mxu0
        %v1003 = vadd.f32 %v474, %v1002
        %1004 = vmatprep.mubr.bf16.mxu0 %v390
        %1005 = vmatmul.mubr.bf16.gmra.mrb[0].mxu0 %v389
        %v1006 = vpop.f32.mrb[0].mxu0
        %v1007 = vadd.f32 %v470, %v1006
        %v1008 = vpop.f32.mrb[0].mxu0
        %v1009 = vadd.f32 %v474, %v1008
        %v1010 = vpop.f32.mrb[0].mxu0
        %v1011 = vadd.f32 %v470, %v1010
        %v1012 = vpop.f32.mrb[0].mxu0
        %v1013 = vadd.f32 %v474, %v1012
        %1014 = vmatprep.mubr.bf16.mxu0 %v392
        %1015 = vmatmul.mubr.bf16.gmra.mrb[0].mxu0 %v391
        %v1016 = vpop.f32.mrb[0].mxu0
        %v1017 = vadd.f32 %v470, %v1016
        %v1018 = vpop.f32.mrb[0].mxu0
        %v1019 = vadd.f32 %v474, %v1018
        %v1020 = vpop.f32.mrb[0].mxu0
        %v1021 = vadd.f32 %v470, %v1020
        %v1022 = vpop.f32.mrb[0].mxu0
        %v1023 = vadd.f32 %v474, %v1022
        %1024 = vdwg.mxu0
        %1025 = vst [vmem:[%s336] sm:$0xff] %v834
        %1026 = vst [vmem:[%s336 + $0x8] sm:$0xff] %v836
        %1027 = vst [vmem:[%s336 + $0x10] sm:$0xff] %v947
        %1028 = vst [vmem:[%s336 + $0x18] sm:$0xff] %v949
        %1029 = vst [vmem:[%s336 + $0x20] sm:$0xff] %v838
        %1030 = vst [vmem:[%s336 + $0x28] sm:$0xff] %v840
        %1031 = vst [vmem:[%s336 + $0x30] sm:$0xff] %v951
        %1032 = vst [vmem:[%s336 + $0x38] sm:$0xff] %v953
        %1033 = vst [vmem:[%s336 + $0x40] sm:$0xff] %v844
        %1034 = vst [vmem:[%s336 + $0x48] sm:$0xff] %v846
        %1035 = vst [vmem:[%s336 + $0x50] sm:$0xff] %v957
        %1036 = vst [vmem:[%s336 + $0x58] sm:$0xff] %v959
        %1037 = vst [vmem:[%s336 + $0x60] sm:$0xff] %v848
        %1038 = vst [vmem:[%s336 + $0x68] sm:$0xff] %v850
        %1039 = vst [vmem:[%s336 + $0x70] sm:$0xff] %v961
        %1040 = vst [vmem:[%s336 + $0x78] sm:$0xff] %v963
        %1041 = vst [vmem:[%s336 + $0x80] sm:$0xff] %v854
        %1042 = vst [vmem:[%s336 + $0x88] sm:$0xff] %v856
        %1043 = vst [vmem:[%s336 + $0x90] sm:$0xff] %v967
        %1044 = vst [vmem:[%s336 + $0x98] sm:$0xff] %v969
        %1045 = vst [vmem:[%s336 + $0xa0] sm:$0xff] %v858
        %1046 = vst [vmem:[%s336 + $0xa8] sm:$0xff] %v860
        %1047 = vst [vmem:[%s336 + $0xb0] sm:$0xff] %v971
        %1048 = vst [vmem:[%s336 + $0xb8] sm:$0xff] %v973
        %1049 = vst [vmem:[%s336 + $0xc0] sm:$0xff] %v864
        %1050 = vst [vmem:[%s336 + $0xc8] sm:$0xff] %v866
        %1051 = vst [vmem:[%s336 + $0xd0] sm:$0xff] %v977
        %1052 = vst [vmem:[%s336 + $0xd8] sm:$0xff] %v979
        %1053 = vst [vmem:[%s336 + $0xe0] sm:$0xff] %v868
        %1054 = vst [vmem:[%s336 + $0xe8] sm:$0xff] %v870
        %1055 = vst [vmem:[%s336 + $0xf0] sm:$0xff] %v981
        %1056 = vst [vmem:[%s336 + $0xf8] sm:$0xff] %v983
        %1057 = vst [vmem:[%s336 + $0x100] sm:$0xff] %v874
        %1058 = vst [vmem:[%s336 + $0x108] sm:$0xff] %v876
        %1059 = vst [vmem:[%s336 + $0x110] sm:$0xff] %v987
        %1060 = vst [vmem:[%s336 + $0x118] sm:$0xff] %v989
        %1061 = vst [vmem:[%s336 + $0x120] sm:$0xff] %v878
        %1062 = vst [vmem:[%s336 + $0x128] sm:$0xff] %v880
        %1063 = vst [vmem:[%s336 + $0x130] sm:$0xff] %v991
        %1064 = vst [vmem:[%s336 + $0x138] sm:$0xff] %v993
        %1065 = vst [vmem:[%s336 + $0x140] sm:$0xff] %v884
        %1066 = vst [vmem:[%s336 + $0x148] sm:$0xff] %v886
        %1067 = vst [vmem:[%s336 + $0x150] sm:$0xff] %v997
        %1068 = vst [vmem:[%s336 + $0x158] sm:$0xff] %v999
        %1069 = vst [vmem:[%s336 + $0x160] sm:$0xff] %v888
        %1070 = vst [vmem:[%s336 + $0x168] sm:$0xff] %v890
        %1071 = vst [vmem:[%s336 + $0x170] sm:$0xff] %v1001
        %1072 = vst [vmem:[%s336 + $0x178] sm:$0xff] %v1003
        %1073 = vst [vmem:[%s336 + $0x180] sm:$0xff] %v894
        %1074 = vst [vmem:[%s336 + $0x188] sm:$0xff] %v896
        %1075 = vst [vmem:[%s336 + $0x190] sm:$0xff] %v1007
        %1076 = vst [vmem:[%s336 + $0x198] sm:$0xff] %v1009
        %1077 = vst [vmem:[%s336 + $0x1a0] sm:$0xff] %v898
        %1078 = vst [vmem:[%s336 + $0x1a8] sm:$0xff] %v900
        %1079 = vst [vmem:[%s336 + $0x1b0] sm:$0xff] %v1011
        %1080 = vst [vmem:[%s336 + $0x1b8] sm:$0xff] %v1013
        %1081 = vst [vmem:[%s336 + $0x1c0] sm:$0xff] %v904
        %1082 = vst [vmem:[%s336 + $0x1c8] sm:$0xff] %v906
        %1083 = vst [vmem:[%s336 + $0x1d0] sm:$0xff] %v1017
        %1084 = vst [vmem:[%s336 + $0x1d8] sm:$0xff] %v1019
        %1085 = vst [vmem:[%s336 + $0x1e0] sm:$0xff] %v908
        %1086 = vst [vmem:[%s336 + $0x1e8] sm:$0xff] %v910
        %1087 = vst [vmem:[%s336 + $0x1f0] sm:$0xff] %v1021
        %1088 = vst [vmem:[%s336 + $0x1f8] sm:$0xff] %v1023
        %v1089 = vld [vmem:[%s3] sm:$0xff]
        %v1090 = vld [vmem:[%s3 + $0x8] sm:$0xff]
        %v1091 = vld [vmem:[%s3 + $0x10] sm:$0xff]
        %v1092 = vld [vmem:[%s3 + $0x18] sm:$0xff]
        %v1093 = vld [vmem:[%s3 + $0x20] sm:$0xff]
        %v1094 = vld [vmem:[%s3 + $0x28] sm:$0xff]
        %v1095 = vld [vmem:[%s3 + $0x30] sm:$0xff]
        %v1096 = vld [vmem:[%s3 + $0x38] sm:$0xff]
        %v1097 = vld [vmem:[%s3 + $0x40] sm:$0xff]
        %v1098 = vld [vmem:[%s3 + $0x48] sm:$0xff]
        %v1099 = vld [vmem:[%s3 + $0x50] sm:$0xff]
        %v1100 = vld [vmem:[%s3 + $0x58] sm:$0xff]
        %v1101 = vld [vmem:[%s3 + $0x60] sm:$0xff]
        %v1102 = vld [vmem:[%s3 + $0x68] sm:$0xff]
        %v1103 = vld [vmem:[%s3 + $0x70] sm:$0xff]
        %v1104 = vld [vmem:[%s3 + $0x78] sm:$0xff]
        %v1105 = vld [vmem:[%s3 + $0x80] sm:$0xff]
        %v1106 = vld [vmem:[%s3 + $0x88] sm:$0xff]
        %v1107 = vld [vmem:[%s3 + $0x90] sm:$0xff]
        %v1108 = vld [vmem:[%s3 + $0x98] sm:$0xff]
        %v1109 = vld [vmem:[%s3 + $0xa0] sm:$0xff]
        %v1110 = vld [vmem:[%s3 + $0xa8] sm:$0xff]
        %v1111 = vld [vmem:[%s3 + $0xb0] sm:$0xff]
        %v1112 = vld [vmem:[%s3 + $0xb8] sm:$0xff]
        %v1113 = vld [vmem:[%s3 + $0xc0] sm:$0xff]
        %v1114 = vld [vmem:[%s3 + $0xc8] sm:$0xff]
        %v1115 = vld [vmem:[%s3 + $0xd0] sm:$0xff]
        %v1116 = vld [vmem:[%s3 + $0xd8] sm:$0xff]
        %v1117 = vld [vmem:[%s3 + $0xe0] sm:$0xff]
        %v1118 = vld [vmem:[%s3 + $0xe8] sm:$0xff]
        %v1119 = vld [vmem:[%s3 + $0xf0] sm:$0xff]
        %v1120 = vld [vmem:[%s3 + $0xf8] sm:$0xff]
        %v1121 = vld [vmem:[#allocation6] sm:$0x3]
        %v1123 = vlaneseq
        %v1124 = vshrl.u32 %v1123, 7
        %v1125 = vsub.s32 0, %v1124
        %v1126 = vrot.slane %v1121, %v1125
        %v1127 = vlaneseq
        %v1128 = vshrl.u32 %v1127, 7
        %v1129 = vsub.s32 1, %v1128
        %v1130 = vrot.slane %v1121, %v1129
        %v1165 = vunpack.c.l.b16 %v1089
        %v1166 = vunpack.c.h.b16 %v1089
        %v1167 = vunpack.c.l.b16 %v1090
        %v1168 = vunpack.c.h.b16 %v1090
        %v1169 = vunpack.c.l.b16 %v1091
        %v1170 = vunpack.c.h.b16 %v1091
        %v1171 = vunpack.c.l.b16 %v1092
        %v1172 = vunpack.c.h.b16 %v1092
        %v1173 = vunpack.c.l.b16 %v1093
        %v1174 = vunpack.c.h.b16 %v1093
        %v1175 = vunpack.c.l.b16 %v1094
        %v1176 = vunpack.c.h.b16 %v1094
        %v1177 = vunpack.c.l.b16 %v1095
        %v1178 = vunpack.c.h.b16 %v1095
        %v1179 = vunpack.c.l.b16 %v1096
        %v1180 = vunpack.c.h.b16 %v1096
        %v1181 = vunpack.c.l.b16 %v1097
        %v1182 = vunpack.c.h.b16 %v1097
        %v1183 = vunpack.c.l.b16 %v1098
        %v1184 = vunpack.c.h.b16 %v1098
        %v1185 = vunpack.c.l.b16 %v1099
        %v1186 = vunpack.c.h.b16 %v1099
        %v1187 = vunpack.c.l.b16 %v1100
        %v1188 = vunpack.c.h.b16 %v1100
        %v1189 = vunpack.c.l.b16 %v1101
        %v1190 = vunpack.c.h.b16 %v1101
        %v1191 = vunpack.c.l.b16 %v1102
        %v1192 = vunpack.c.h.b16 %v1102
        %v1193 = vunpack.c.l.b16 %v1103
        %v1194 = vunpack.c.h.b16 %v1103
        %v1195 = vunpack.c.l.b16 %v1104
        %v1196 = vunpack.c.h.b16 %v1104
        %v1197 = vunpack.c.l.b16 %v1105
        %v1198 = vunpack.c.h.b16 %v1105
        %v1199 = vunpack.c.l.b16 %v1106
        %v1200 = vunpack.c.h.b16 %v1106
        %v1201 = vunpack.c.l.b16 %v1107
        %v1202 = vunpack.c.h.b16 %v1107
        %v1203 = vunpack.c.l.b16 %v1108
        %v1204 = vunpack.c.h.b16 %v1108
        %v1205 = vunpack.c.l.b16 %v1109
        %v1206 = vunpack.c.h.b16 %v1109
        %v1207 = vunpack.c.l.b16 %v1110
        %v1208 = vunpack.c.h.b16 %v1110
        %v1209 = vunpack.c.l.b16 %v1111
        %v1210 = vunpack.c.h.b16 %v1111
        %v1211 = vunpack.c.l.b16 %v1112
        %v1212 = vunpack.c.h.b16 %v1112
        %v1213 = vunpack.c.l.b16 %v1113
        %v1214 = vunpack.c.h.b16 %v1113
        %v1215 = vunpack.c.l.b16 %v1114
        %v1216 = vunpack.c.h.b16 %v1114
        %v1217 = vunpack.c.l.b16 %v1115
        %v1218 = vunpack.c.h.b16 %v1115
        %v1219 = vunpack.c.l.b16 %v1116
        %v1220 = vunpack.c.h.b16 %v1116
        %v1221 = vunpack.c.l.b16 %v1117
        %v1222 = vunpack.c.h.b16 %v1117
        %v1223 = vunpack.c.l.b16 %v1118
        %v1224 = vunpack.c.h.b16 %v1118
        %v1225 = vunpack.c.l.b16 %v1119
        %v1226 = vunpack.c.h.b16 %v1119
        %v1227 = vunpack.c.l.b16 %v1120
        %v1228 = vunpack.c.h.b16 %v1120
        %v1229 = vpack.c.b16 %v1167, %v1165
        %v1230 = vpack.c.b16 %v1168, %v1166
        %v1231 = vpack.c.b16 %v1171, %v1169
        %v1232 = vpack.c.b16 %v1172, %v1170
        %v1233 = vpack.c.b16 %v1175, %v1173
        %v1234 = vpack.c.b16 %v1176, %v1174
        %v1235 = vpack.c.b16 %v1179, %v1177
        %v1236 = vpack.c.b16 %v1180, %v1178
        %v1237 = vpack.c.b16 %v1183, %v1181
        %v1238 = vpack.c.b16 %v1184, %v1182
        %v1239 = vpack.c.b16 %v1187, %v1185
        %v1240 = vpack.c.b16 %v1188, %v1186
        %v1241 = vpack.c.b16 %v1191, %v1189
        %v1242 = vpack.c.b16 %v1192, %v1190
        %v1243 = vpack.c.b16 %v1195, %v1193
        %v1244 = vpack.c.b16 %v1196, %v1194
        %v1245 = vpack.c.b16 %v1199, %v1197
        %v1246 = vpack.c.b16 %v1200, %v1198
        %v1247 = vpack.c.b16 %v1203, %v1201
        %v1248 = vpack.c.b16 %v1204, %v1202
        %v1249 = vpack.c.b16 %v1207, %v1205
        %v1250 = vpack.c.b16 %v1208, %v1206
        %v1251 = vpack.c.b16 %v1211, %v1209
        %v1252 = vpack.c.b16 %v1212, %v1210
        %v1253 = vpack.c.b16 %v1215, %v1213
        %v1254 = vpack.c.b16 %v1216, %v1214
        %v1255 = vpack.c.b16 %v1219, %v1217
        %v1256 = vpack.c.b16 %v1220, %v1218
        %v1257 = vpack.c.b16 %v1223, %v1221
        %v1258 = vpack.c.b16 %v1224, %v1222
        %v1259 = vpack.c.b16 %v1227, %v1225
        %v1260 = vpack.c.b16 %v1228, %v1226
        %1293 = vmatprep.subr.bf16.mxu0 %v1230
        %1294 = vmatpush1.bf16.msra.mxu0 %v1229
        %1295 = vmatprep.subr.bf16.mxu0 %v1232
        %1296 = vmatpush1.bf16.msra.mxu0 %v1231
        %1297 = vmatprep.subr.bf16.mxu0 %v1234
        %1298 = vmatpush1.bf16.msra.mxu0 %v1233
        %1299 = vmatprep.subr.bf16.mxu0 %v1236
        %1300 = vmatpush1.bf16.msra.mxu0 %v1235
        %1301 = vmatprep.subr.bf16.mxu0 %v1238
        %1302 = vmatpush1.bf16.msra.mxu0 %v1237
        %1303 = vmatprep.subr.bf16.mxu0 %v1240
        %1304 = vmatpush1.bf16.msra.mxu0 %v1239
        %1305 = vmatprep.subr.bf16.mxu0 %v1242
        %1306 = vmatpush1.bf16.msra.mxu0 %v1241
        %1307 = vmatprep.subr.bf16.mxu0 %v1244
        %1308 = vmatpush1.bf16.msra.mxu0 %v1243
        %1309 = vmatprep.subr.bf16.mxu0 %v1246
        %1310 = vmatpush1.bf16.msra.mxu0 %v1245
        %1311 = vmatprep.subr.bf16.mxu0 %v1248
        %1312 = vmatpush1.bf16.msra.mxu0 %v1247
        %1313 = vmatprep.subr.bf16.mxu0 %v1250
        %1314 = vmatpush1.bf16.msra.mxu0 %v1249
        %1315 = vmatprep.subr.bf16.mxu0 %v1252
        %1316 = vmatpush1.bf16.msra.mxu0 %v1251
        %1317 = vmatprep.subr.bf16.mxu0 %v1254
        %1318 = vmatpush1.bf16.msra.mxu0 %v1253
        %1319 = vmatprep.subr.bf16.mxu0 %v1256
        %1320 = vmatpush1.bf16.msra.mxu0 %v1255
        %1321 = vmatprep.subr.bf16.mxu0 %v1258
        %1322 = vmatpush1.bf16.msra.mxu0 %v1257
        %1323 = vmatprep.subr.bf16.mxu0 %v1260
        %1324 = vmatpush1.bf16.msra.mxu0 %v1259
        %1325 = vmatprep.mubr.bf16.mxu0 %v378
        %1326 = vmatmul.mubr.bf16.gmra.mrb[0].mxu0 %v377
        %v1327 = vpop.f32.mrb[0].mxu0
        %v1328 = vadd.f32 %v1126, %v1327
        %v1329 = vpop.f32.mrb[0].mxu0
        %v1330 = vadd.f32 %v1130, %v1329
        %v1331 = vpop.f32.mrb[0].mxu0
        %v1332 = vadd.f32 %v1126, %v1331
        %v1333 = vpop.f32.mrb[0].mxu0
        %v1334 = vadd.f32 %v1130, %v1333
        %1335 = vmatprep.mubr.bf16.mxu0 %v380
        %1336 = vmatmul.mubr.bf16.gmra.mrb[0].mxu0 %v379
        %v1337 = vpop.f32.mrb[0].mxu0
        %v1338 = vadd.f32 %v1126, %v1337
        %v1339 = vpop.f32.mrb[0].mxu0
        %v1340 = vadd.f32 %v1130, %v1339
        %v1341 = vpop.f32.mrb[0].mxu0
        %v1342 = vadd.f32 %v1126, %v1341
        %v1343 = vpop.f32.mrb[0].mxu0
        %v1344 = vadd.f32 %v1130, %v1343
        %1345 = vmatprep.mubr.bf16.mxu0 %v382
        %1346 = vmatmul.mubr.bf16.gmra.mrb[0].mxu0 %v381
        %v1347 = vpop.f32.mrb[0].mxu0
        %v1348 = vadd.f32 %v1126, %v1347
        %v1349 = vpop.f32.mrb[0].mxu0
        %v1350 = vadd.f32 %v1130, %v1349
        %v1351 = vpop.f32.mrb[0].mxu0
        %v1352 = vadd.f32 %v1126, %v1351
        %v1353 = vpop.f32.mrb[0].mxu0
        %v1354 = vadd.f32 %v1130, %v1353
        %1355 = vmatprep.mubr.bf16.mxu0 %v384
        %1356 = vmatmul.mubr.bf16.gmra.mrb[0].mxu0 %v383
        %v1357 = vpop.f32.mrb[0].mxu0
        %v1358 = vadd.f32 %v1126, %v1357
        %v1359 = vpop.f32.mrb[0].mxu0
        %v1360 = vadd.f32 %v1130, %v1359
        %v1361 = vpop.f32.mrb[0].mxu0
        %v1362 = vadd.f32 %v1126, %v1361
        %v1363 = vpop.f32.mrb[0].mxu0
        %v1364 = vadd.f32 %v1130, %v1363
        %1365 = vmatprep.mubr.bf16.mxu0 %v386
        %1366 = vmatmul.mubr.bf16.gmra.mrb[0].mxu0 %v385
        %v1367 = vpop.f32.mrb[0].mxu0
        %v1368 = vadd.f32 %v1126, %v1367
        %v1369 = vpop.f32.mrb[0].mxu0
        %v1370 = vadd.f32 %v1130, %v1369
        %v1371 = vpop.f32.mrb[0].mxu0
        %v1372 = vadd.f32 %v1126, %v1371
        %v1373 = vpop.f32.mrb[0].mxu0
        %v1374 = vadd.f32 %v1130, %v1373
        %1375 = vmatprep.mubr.bf16.mxu0 %v388
        %1376 = vmatmul.mubr.bf16.gmra.mrb[0].mxu0 %v387
        %v1377 = vpop.f32.mrb[0].mxu0
        %v1378 = vadd.f32 %v1126, %v1377
        %v1379 = vpop.f32.mrb[0].mxu0
        %v1380 = vadd.f32 %v1130, %v1379
        %v1381 = vpop.f32.mrb[0].mxu0
        %v1382 = vadd.f32 %v1126, %v1381
        %v1383 = vpop.f32.mrb[0].mxu0
        %v1384 = vadd.f32 %v1130, %v1383
        %1385 = vmatprep.mubr.bf16.mxu0 %v390
        %1386 = vmatmul.mubr.bf16.gmra.mrb[0].mxu0 %v389
        %v1387 = vpop.f32.mrb[0].mxu0
        %v1388 = vadd.f32 %v1126, %v1387
        %v1389 = vpop.f32.mrb[0].mxu0
        %v1390 = vadd.f32 %v1130, %v1389
        %v1391 = vpop.f32.mrb[0].mxu0
        %v1392 = vadd.f32 %v1126, %v1391
        %v1393 = vpop.f32.mrb[0].mxu0
        %v1394 = vadd.f32 %v1130, %v1393
        %1395 = vmatprep.mubr.bf16.mxu0 %v392
        %1396 = vmatmul.mubr.bf16.gmra.mrb[0].mxu0 %v391
        %v1397 = vpop.f32.mrb[0].mxu0
        %v1398 = vadd.f32 %v1126, %v1397
        %v1399 = vpop.f32.mrb[0].mxu0
        %v1400 = vadd.f32 %v1130, %v1399
        %v1401 = vpop.f32.mrb[0].mxu0
        %v1402 = vadd.f32 %v1126, %v1401
        %v1403 = vpop.f32.mrb[0].mxu0
        %v1404 = vadd.f32 %v1130, %v1403
        %1405 = vdwg.mxu0
        %v1406 = vmax.f32 %v1328, %v1330
        %1407 = vmax.xlane.f32.xlu0 %v1406
        %v1408 = vpop.xlane.xlu0 %1407
        %v1409 = vmax.f32 %v1332, %v1334
        %1410 = vmax.xlane.f32.xlu0 %v1409
        %v1411 = vpop.xlane.xlu0 %1410
        %v1412 = vmax.f32 %v1338, %v1340
        %1413 = vmax.xlane.f32.xlu0 %v1412
        %v1414 = vpop.xlane.xlu0 %1413
        %v1415 = vmax.f32 %v1342, %v1344
        %1416 = vmax.xlane.f32.xlu0 %v1415
        %v1417 = vpop.xlane.xlu0 %1416
        %v1418 = vmax.f32 %v1348, %v1350
        %1419 = vmax.xlane.f32.xlu0 %v1418
        %v1420 = vpop.xlane.xlu0 %1419
        %v1421 = vmax.f32 %v1352, %v1354
        %1422 = vmax.xlane.f32.xlu0 %v1421
        %v1423 = vpop.xlane.xlu0 %1422
        %v1424 = vmax.f32 %v1358, %v1360
        %1425 = vmax.xlane.f32.xlu0 %v1424
        %v1426 = vpop.xlane.xlu0 %1425
        %v1427 = vmax.f32 %v1362, %v1364
        %1428 = vmax.xlane.f32.xlu0 %v1427
        %v1429 = vpop.xlane.xlu0 %1428
        %v1430 = vmax.f32 %v1368, %v1370
        %1431 = vmax.xlane.f32.xlu0 %v1430
        %v1432 = vpop.xlane.xlu0 %1431
        %v1433 = vmax.f32 %v1372, %v1374
        %1434 = vmax.xlane.f32.xlu0 %v1433
        %v1435 = vpop.xlane.xlu0 %1434
        %v1436 = vmax.f32 %v1378, %v1380
        %1437 = vmax.xlane.f32.xlu0 %v1436
        %v1438 = vpop.xlane.xlu0 %1437
        %v1439 = vmax.f32 %v1382, %v1384
        %1440 = vmax.xlane.f32.xlu0 %v1439
        %v1441 = vpop.xlane.xlu0 %1440
        %v1442 = vmax.f32 %v1388, %v1390
        %1443 = vmax.xlane.f32.xlu0 %v1442
        %v1444 = vpop.xlane.xlu0 %1443
        %v1445 = vmax.f32 %v1392, %v1394
        %1446 = vmax.xlane.f32.xlu0 %v1445
        %v1447 = vpop.xlane.xlu0 %1446
        %v1448 = vmax.f32 %v1398, %v1400
        %1449 = vmax.xlane.f32.xlu0 %v1448
        %v1450 = vpop.xlane.xlu0 %1449
        %v1451 = vmax.f32 %v1402, %v1404
        %1452 = vmax.xlane.f32.xlu0 %v1451
        %v1453 = vpop.xlane.xlu0 %1452
        %v1454 = vsub.f32 %v1328, %v1408
        %v1455 = vsub.f32 %v1330, %v1408
        %v1456 = vsub.f32 %v1332, %v1411
        %v1457 = vsub.f32 %v1334, %v1411
        %v1458 = vsub.f32 %v1338, %v1414
        %v1459 = vsub.f32 %v1340, %v1414
        %v1460 = vsub.f32 %v1342, %v1417
        %v1461 = vsub.f32 %v1344, %v1417
        %v1462 = vsub.f32 %v1348, %v1420
        %v1463 = vsub.f32 %v1350, %v1420
        %v1464 = vsub.f32 %v1352, %v1423
        %v1465 = vsub.f32 %v1354, %v1423
        %v1466 = vsub.f32 %v1358, %v1426
        %v1467 = vsub.f32 %v1360, %v1426
        %v1468 = vsub.f32 %v1362, %v1429
        %v1469 = vsub.f32 %v1364, %v1429
        %v1470 = vsub.f32 %v1368, %v1432
        %v1471 = vsub.f32 %v1370, %v1432
        %v1472 = vsub.f32 %v1372, %v1435
        %v1473 = vsub.f32 %v1374, %v1435
        %v1474 = vsub.f32 %v1378, %v1438
        %v1475 = vsub.f32 %v1380, %v1438
        %v1476 = vsub.f32 %v1382, %v1441
        %v1477 = vsub.f32 %v1384, %v1441
        %v1478 = vsub.f32 %v1388, %v1444
        %v1479 = vsub.f32 %v1390, %v1444
        %v1480 = vsub.f32 %v1392, %v1447
        %v1481 = vsub.f32 %v1394, %v1447
        %v1482 = vsub.f32 %v1398, %v1450
        %v1483 = vsub.f32 %v1400, %v1450
        %v1484 = vsub.f32 %v1402, %v1453
        %v1485 = vsub.f32 %v1404, %v1453
        %v1486 = vmul.f32 %v1454, 1.442695
        %v1487 = vpow.pop %v1486
        %v1488 = vmul.f32 %v1455, 1.442695
        %v1489 = vpow.pop %v1488
        %v1490 = vmul.f32 %v1456, 1.442695
        %v1491 = vpow.pop %v1490
        %v1492 = vmul.f32 %v1457, 1.442695
        %v1493 = vpow.pop %v1492
        %v1494 = vmul.f32 %v1458, 1.442695
        %v1495 = vpow.pop %v1494
        %v1496 = vmul.f32 %v1459, 1.442695
        %v1497 = vpow.pop %v1496
        %v1498 = vmul.f32 %v1460, 1.442695
        %v1499 = vpow.pop %v1498
        %v1500 = vmul.f32 %v1461, 1.442695
        %v1501 = vpow.pop %v1500
        %v1502 = vmul.f32 %v1462, 1.442695
        %v1503 = vpow.pop %v1502
        %v1504 = vmul.f32 %v1463, 1.442695
        %v1505 = vpow.pop %v1504
        %v1506 = vmul.f32 %v1464, 1.442695
        %v1507 = vpow.pop %v1506
        %v1508 = vmul.f32 %v1465, 1.442695
        %v1509 = vpow.pop %v1508
        %v1510 = vmul.f32 %v1466, 1.442695
        %v1511 = vpow.pop %v1510
        %v1512 = vmul.f32 %v1467, 1.442695
        %v1513 = vpow.pop %v1512
        %v1514 = vmul.f32 %v1468, 1.442695
        %v1515 = vpow.pop %v1514
        %v1516 = vmul.f32 %v1469, 1.442695
        %v1517 = vpow.pop %v1516
        %v1518 = vmul.f32 %v1470, 1.442695
        %v1519 = vpow.pop %v1518
        %v1520 = vmul.f32 %v1471, 1.442695
        %v1521 = vpow.pop %v1520
        %v1522 = vmul.f32 %v1472, 1.442695
        %v1523 = vpow.pop %v1522
        %v1524 = vmul.f32 %v1473, 1.442695
        %v1525 = vpow.pop %v1524
        %v1526 = vmul.f32 %v1474, 1.442695
        %v1527 = vpow.pop %v1526
        %v1528 = vmul.f32 %v1475, 1.442695
        %v1529 = vpow.pop %v1528
        %v1530 = vmul.f32 %v1476, 1.442695
        %v1531 = vpow.pop %v1530
        %v1532 = vmul.f32 %v1477, 1.442695
        %v1533 = vpow.pop %v1532
        %v1534 = vmul.f32 %v1478, 1.442695
        %v1535 = vpow.pop %v1534
        %v1536 = vmul.f32 %v1479, 1.442695
        %v1537 = vpow.pop %v1536
        %v1538 = vmul.f32 %v1480, 1.442695
        %v1539 = vpow.pop %v1538
        %v1540 = vmul.f32 %v1481, 1.442695
        %v1541 = vpow.pop %v1540
        %v1542 = vmul.f32 %v1482, 1.442695
        %v1543 = vpow.pop %v1542
        %v1544 = vmul.f32 %v1483, 1.442695
        %v1545 = vpow.pop %v1544
        %v1546 = vmul.f32 %v1484, 1.442695
        %v1547 = vpow.pop %v1546
        %v1548 = vmul.f32 %v1485, 1.442695
        %v1549 = vpow.pop %v1548
        %v1550 = vpack.c.bf16 %v1491, %v1487
        %v1551 = vpack.c.bf16 %v1493, %v1489
        %v1552 = vpack.c.bf16 %v1499, %v1495
        %v1553 = vpack.c.bf16 %v1501, %v1497
        %v1554 = vpack.c.bf16 %v1507, %v1503
        %v1555 = vpack.c.bf16 %v1509, %v1505
        %v1556 = vpack.c.bf16 %v1515, %v1511
        %v1557 = vpack.c.bf16 %v1517, %v1513
        %v1558 = vpack.c.bf16 %v1523, %v1519
        %v1559 = vpack.c.bf16 %v1525, %v1521
        %v1560 = vpack.c.bf16 %v1531, %v1527
        %v1561 = vpack.c.bf16 %v1533, %v1529
        %v1562 = vpack.c.bf16 %v1539, %v1535
        %v1563 = vpack.c.bf16 %v1541, %v1537
        %v1564 = vpack.c.bf16 %v1547, %v1543
        %v1565 = vpack.c.bf16 %v1549, %v1545
        %v1566 = vld [vmem:[%s5] sm:$0xff]
        %v1567 = vld [vmem:[%s5 + $0x8] sm:$0xff]
        %v1568 = vld [vmem:[%s5 + $0x10] sm:$0xff]
        %v1569 = vld [vmem:[%s5 + $0x18] sm:$0xff]
        %v1570 = vld [vmem:[%s5 + $0x20] sm:$0xff]
        %v1571 = vld [vmem:[%s5 + $0x28] sm:$0xff]
        %v1572 = vld [vmem:[%s5 + $0x30] sm:$0xff]
        %v1573 = vld [vmem:[%s5 + $0x38] sm:$0xff]
        %v1574 = vld [vmem:[%s5 + $0x40] sm:$0xff]
        %v1575 = vld [vmem:[%s5 + $0x48] sm:$0xff]
        %v1576 = vld [vmem:[%s5 + $0x50] sm:$0xff]
        %v1577 = vld [vmem:[%s5 + $0x58] sm:$0xff]
        %v1578 = vld [vmem:[%s5 + $0x60] sm:$0xff]
        %v1579 = vld [vmem:[%s5 + $0x68] sm:$0xff]
        %v1580 = vld [vmem:[%s5 + $0x70] sm:$0xff]
        %v1581 = vld [vmem:[%s5 + $0x78] sm:$0xff]
        %v1582 = vld [vmem:[%s5 + $0x80] sm:$0xff]
        %v1583 = vld [vmem:[%s5 + $0x88] sm:$0xff]
        %v1584 = vld [vmem:[%s5 + $0x90] sm:$0xff]
        %v1585 = vld [vmem:[%s5 + $0x98] sm:$0xff]
        %v1586 = vld [vmem:[%s5 + $0xa0] sm:$0xff]
        %v1587 = vld [vmem:[%s5 + $0xa8] sm:$0xff]
        %v1588 = vld [vmem:[%s5 + $0xb0] sm:$0xff]
        %v1589 = vld [vmem:[%s5 + $0xb8] sm:$0xff]
        %v1590 = vld [vmem:[%s5 + $0xc0] sm:$0xff]
        %v1591 = vld [vmem:[%s5 + $0xc8] sm:$0xff]
        %v1592 = vld [vmem:[%s5 + $0xd0] sm:$0xff]
        %v1593 = vld [vmem:[%s5 + $0xd8] sm:$0xff]
        %v1594 = vld [vmem:[%s5 + $0xe0] sm:$0xff]
        %v1595 = vld [vmem:[%s5 + $0xe8] sm:$0xff]
        %v1596 = vld [vmem:[%s5 + $0xf0] sm:$0xff]
        %v1597 = vld [vmem:[%s5 + $0xf8] sm:$0xff]
        %v1630 = vunpack.c.l.b16 %v1566
        %v1631 = vunpack.c.h.b16 %v1566
        %v1632 = vunpack.c.l.b16 %v1567
        %v1633 = vunpack.c.h.b16 %v1567
        %v1634 = vunpack.c.l.b16 %v1568
        %v1635 = vunpack.c.h.b16 %v1568
        %v1636 = vunpack.c.l.b16 %v1569
        %v1637 = vunpack.c.h.b16 %v1569
        %v1638 = vunpack.c.l.b16 %v1570
        %v1639 = vunpack.c.h.b16 %v1570
        %v1640 = vunpack.c.l.b16 %v1571
        %v1641 = vunpack.c.h.b16 %v1571
        %v1642 = vunpack.c.l.b16 %v1572
        %v1643 = vunpack.c.h.b16 %v1572
        %v1644 = vunpack.c.l.b16 %v1573
        %v1645 = vunpack.c.h.b16 %v1573
        %v1646 = vunpack.c.l.b16 %v1574
        %v1647 = vunpack.c.h.b16 %v1574
        %v1648 = vunpack.c.l.b16 %v1575
        %v1649 = vunpack.c.h.b16 %v1575
        %v1650 = vunpack.c.l.b16 %v1576
        %v1651 = vunpack.c.h.b16 %v1576
        %v1652 = vunpack.c.l.b16 %v1577
        %v1653 = vunpack.c.h.b16 %v1577
        %v1654 = vunpack.c.l.b16 %v1578
        %v1655 = vunpack.c.h.b16 %v1578
        %v1656 = vunpack.c.l.b16 %v1579
        %v1657 = vunpack.c.h.b16 %v1579
        %v1658 = vunpack.c.l.b16 %v1580
        %v1659 = vunpack.c.h.b16 %v1580
        %v1660 = vunpack.c.l.b16 %v1581
        %v1661 = vunpack.c.h.b16 %v1581
        %v1662 = vunpack.c.l.b16 %v1582
        %v1663 = vunpack.c.h.b16 %v1582
        %v1664 = vunpack.c.l.b16 %v1583
        %v1665 = vunpack.c.h.b16 %v1583
        %v1666 = vunpack.c.l.b16 %v1584
        %v1667 = vunpack.c.h.b16 %v1584
        %v1668 = vunpack.c.l.b16 %v1585
        %v1669 = vunpack.c.h.b16 %v1585
        %v1670 = vunpack.c.l.b16 %v1586
        %v1671 = vunpack.c.h.b16 %v1586
        %v1672 = vunpack.c.l.b16 %v1587
        %v1673 = vunpack.c.h.b16 %v1587
        %v1674 = vunpack.c.l.b16 %v1588
        %v1675 = vunpack.c.h.b16 %v1588
        %v1676 = vunpack.c.l.b16 %v1589
        %v1677 = vunpack.c.h.b16 %v1589
        %v1678 = vunpack.c.l.b16 %v1590
        %v1679 = vunpack.c.h.b16 %v1590
        %v1680 = vunpack.c.l.b16 %v1591
        %v1681 = vunpack.c.h.b16 %v1591
        %v1682 = vunpack.c.l.b16 %v1592
        %v1683 = vunpack.c.h.b16 %v1592
        %v1684 = vunpack.c.l.b16 %v1593
        %v1685 = vunpack.c.h.b16 %v1593
        %v1686 = vunpack.c.l.b16 %v1594
        %v1687 = vunpack.c.h.b16 %v1594
        %v1688 = vunpack.c.l.b16 %v1595
        %v1689 = vunpack.c.h.b16 %v1595
        %v1690 = vunpack.c.l.b16 %v1596
        %v1691 = vunpack.c.h.b16 %v1596
        %v1692 = vunpack.c.l.b16 %v1597
        %v1693 = vunpack.c.h.b16 %v1597
        %v1694 = vpack.c.b16 %v1632, %v1630
        %v1695 = vpack.c.b16 %v1633, %v1631
        %v1696 = vpack.c.b16 %v1636, %v1634
        %v1697 = vpack.c.b16 %v1637, %v1635
        %v1698 = vpack.c.b16 %v1640, %v1638
        %v1699 = vpack.c.b16 %v1641, %v1639
        %v1700 = vpack.c.b16 %v1644, %v1642
        %v1701 = vpack.c.b16 %v1645, %v1643
        %v1702 = vpack.c.b16 %v1648, %v1646
        %v1703 = vpack.c.b16 %v1649, %v1647
        %v1704 = vpack.c.b16 %v1652, %v1650
        %v1705 = vpack.c.b16 %v1653, %v1651
        %v1706 = vpack.c.b16 %v1656, %v1654
        %v1707 = vpack.c.b16 %v1657, %v1655
        %v1708 = vpack.c.b16 %v1660, %v1658
        %v1709 = vpack.c.b16 %v1661, %v1659
        %v1710 = vpack.c.b16 %v1664, %v1662
        %v1711 = vpack.c.b16 %v1665, %v1663
        %v1712 = vpack.c.b16 %v1668, %v1666
        %v1713 = vpack.c.b16 %v1669, %v1667
        %v1714 = vpack.c.b16 %v1672, %v1670
        %v1715 = vpack.c.b16 %v1673, %v1671
        %v1716 = vpack.c.b16 %v1676, %v1674
        %v1717 = vpack.c.b16 %v1677, %v1675
        %v1718 = vpack.c.b16 %v1680, %v1678
        %v1719 = vpack.c.b16 %v1681, %v1679
        %v1720 = vpack.c.b16 %v1684, %v1682
        %v1721 = vpack.c.b16 %v1685, %v1683
        %v1722 = vpack.c.b16 %v1688, %v1686
        %v1723 = vpack.c.b16 %v1689, %v1687
        %v1724 = vpack.c.b16 %v1692, %v1690
        %v1725 = vpack.c.b16 %v1693, %v1691
        %1758 = vmatprep.subr.bf16.mxu0 %v1695
        %1759 = vmatpush1.bf16.msra.mxu0 %v1694
        %1760 = vmatprep.subr.bf16.mxu0 %v1697
        %1761 = vmatpush1.bf16.msra.mxu0 %v1696
        %1762 = vmatprep.subr.bf16.mxu0 %v1699
        %1763 = vmatpush1.bf16.msra.mxu0 %v1698
        %1764 = vmatprep.subr.bf16.mxu0 %v1701
        %1765 = vmatpush1.bf16.msra.mxu0 %v1700
        %1766 = vmatprep.subr.bf16.mxu0 %v1703
        %1767 = vmatpush1.bf16.msra.mxu0 %v1702
        %1768 = vmatprep.subr.bf16.mxu0 %v1705
        %1769 = vmatpush1.bf16.msra.mxu0 %v1704
        %1770 = vmatprep.subr.bf16.mxu0 %v1707
        %1771 = vmatpush1.bf16.msra.mxu0 %v1706
        %1772 = vmatprep.subr.bf16.mxu0 %v1709
        %1773 = vmatpush1.bf16.msra.mxu0 %v1708
        %1774 = vmatprep.subr.bf16.mxu0 %v1711
        %1775 = vmatpush1.bf16.msra.mxu0 %v1710
        %1776 = vmatprep.subr.bf16.mxu0 %v1713
        %1777 = vmatpush1.bf16.msra.mxu0 %v1712
        %1778 = vmatprep.subr.bf16.mxu0 %v1715
        %1779 = vmatpush1.bf16.msra.mxu0 %v1714
        %1780 = vmatprep.subr.bf16.mxu0 %v1717
        %1781 = vmatpush1.bf16.msra.mxu0 %v1716
        %1782 = vmatprep.subr.bf16.mxu0 %v1719
        %1783 = vmatpush1.bf16.msra.mxu0 %v1718
        %1784 = vmatprep.subr.bf16.mxu0 %v1721
        %1785 = vmatpush1.bf16.msra.mxu0 %v1720
        %1786 = vmatprep.subr.bf16.mxu0 %v1723
        %1787 = vmatpush1.bf16.msra.mxu0 %v1722
        %1788 = vmatprep.subr.bf16.mxu0 %v1725
        %1789 = vmatpush1.bf16.msra.mxu0 %v1724
        %1790 = vmatprep.mubr.bf16.mxu0 %v1551
        %1791 = vmatmul.mubr.bf16.gmra.mrb[0].mxu0 %v1550
        %v1792 = vpop.f32.mrb[0].mxu0
        %v1793 = vadd.f32 0.0, %v1792
        %v1794 = vpop.f32.mrb[0].mxu0
        %v1795 = vadd.f32 0.0, %v1794
        %v1796 = vpop.f32.mrb[0].mxu0
        %v1797 = vadd.f32 0.0, %v1796
        %v1798 = vpop.f32.mrb[0].mxu0
        %v1799 = vadd.f32 0.0, %v1798
        %1800 = vmatprep.mubr.bf16.mxu0 %v1553
        %1801 = vmatmul.mubr.bf16.gmra.mrb[0].mxu0 %v1552
        %v1802 = vpop.f32.mrb[0].mxu0
        %v1803 = vadd.f32 0.0, %v1802
        %v1804 = vpop.f32.mrb[0].mxu0
        %v1805 = vadd.f32 0.0, %v1804
        %v1806 = vpop.f32.mrb[0].mxu0
        %v1807 = vadd.f32 0.0, %v1806
        %v1808 = vpop.f32.mrb[0].mxu0
        %v1809 = vadd.f32 0.0, %v1808
        %1810 = vmatprep.mubr.bf16.mxu0 %v1555
        %1811 = vmatmul.mubr.bf16.gmra.mrb[0].mxu0 %v1554
        %v1812 = vpop.f32.mrb[0].mxu0
        %v1813 = vadd.f32 0.0, %v1812
        %v1814 = vpop.f32.mrb[0].mxu0
        %v1815 = vadd.f32 0.0, %v1814
        %v1816 = vpop.f32.mrb[0].mxu0
        %v1817 = vadd.f32 0.0, %v1816
        %v1818 = vpop.f32.mrb[0].mxu0
        %v1819 = vadd.f32 0.0, %v1818
        %1820 = vmatprep.mubr.bf16.mxu0 %v1557
        %1821 = vmatmul.mubr.bf16.gmra.mrb[0].mxu0 %v1556
        %v1822 = vpop.f32.mrb[0].mxu0
        %v1823 = vadd.f32 0.0, %v1822
        %v1824 = vpop.f32.mrb[0].mxu0
        %v1825 = vadd.f32 0.0, %v1824
        %v1826 = vpop.f32.mrb[0].mxu0
        %v1827 = vadd.f32 0.0, %v1826
        %v1828 = vpop.f32.mrb[0].mxu0
        %v1829 = vadd.f32 0.0, %v1828
        %1830 = vmatprep.mubr.bf16.mxu0 %v1559
        %1831 = vmatmul.mubr.bf16.gmra.mrb[0].mxu0 %v1558
        %v1832 = vpop.f32.mrb[0].mxu0
        %v1833 = vadd.f32 0.0, %v1832
        %v1834 = vpop.f32.mrb[0].mxu0
        %v1835 = vadd.f32 0.0, %v1834
        %v1836 = vpop.f32.mrb[0].mxu0
        %v1837 = vadd.f32 0.0, %v1836
        %v1838 = vpop.f32.mrb[0].mxu0
        %v1839 = vadd.f32 0.0, %v1838
        %1840 = vmatprep.mubr.bf16.mxu0 %v1561
        %1841 = vmatmul.mubr.bf16.gmra.mrb[0].mxu0 %v1560
        %v1842 = vpop.f32.mrb[0].mxu0
        %v1843 = vadd.f32 0.0, %v1842
        %v1844 = vpop.f32.mrb[0].mxu0
        %v1845 = vadd.f32 0.0, %v1844
        %v1846 = vpop.f32.mrb[0].mxu0
        %v1847 = vadd.f32 0.0, %v1846
        %v1848 = vpop.f32.mrb[0].mxu0
        %v1849 = vadd.f32 0.0, %v1848
        %1850 = vmatprep.mubr.bf16.mxu0 %v1563
        %1851 = vmatmul.mubr.bf16.gmra.mrb[0].mxu0 %v1562
        %v1852 = vpop.f32.mrb[0].mxu0
        %v1853 = vadd.f32 0.0, %v1852
        %v1854 = vpop.f32.mrb[0].mxu0
        %v1855 = vadd.f32 0.0, %v1854
        %v1856 = vpop.f32.mrb[0].mxu0
        %v1857 = vadd.f32 0.0, %v1856
        %v1858 = vpop.f32.mrb[0].mxu0
        %v1859 = vadd.f32 0.0, %v1858
        %1860 = vmatprep.mubr.bf16.mxu0 %v1565
        %1861 = vmatmul.mubr.bf16.gmra.mrb[0].mxu0 %v1564
        %v1862 = vpop.f32.mrb[0].mxu0
        %v1863 = vadd.f32 0.0, %v1862
        %v1864 = vpop.f32.mrb[0].mxu0
        %v1865 = vadd.f32 0.0, %v1864
        %v1866 = vpop.f32.mrb[0].mxu0
        %v1867 = vadd.f32 0.0, %v1866
        %v1868 = vpop.f32.mrb[0].mxu0
        %v1869 = vadd.f32 0.0, %v1868
        %1870 = vdwg.mxu0
        %v1871 = vrcp.pop %v1793
        %v1872 = vrcp.pop %v1795
        %v1873 = vrcp.pop %v1797
        %v1874 = vrcp.pop %v1799
        %v1875 = vrcp.pop %v1803
        %v1876 = vrcp.pop %v1805
        %v1877 = vrcp.pop %v1807
        %v1878 = vrcp.pop %v1809
        %v1879 = vrcp.pop %v1813
        %v1880 = vrcp.pop %v1815
        %v1881 = vrcp.pop %v1817
        %v1882 = vrcp.pop %v1819
        %v1883 = vrcp.pop %v1823
        %v1884 = vrcp.pop %v1825
        %v1885 = vrcp.pop %v1827
        %v1886 = vrcp.pop %v1829
        %v1887 = vrcp.pop %v1833
        %v1888 = vrcp.pop %v1835
        %v1889 = vrcp.pop %v1837
        %v1890 = vrcp.pop %v1839
        %v1891 = vrcp.pop %v1843
        %v1892 = vrcp.pop %v1845
        %v1893 = vrcp.pop %v1847
        %v1894 = vrcp.pop %v1849
        %v1895 = vrcp.pop %v1853
        %v1896 = vrcp.pop %v1855
        %v1897 = vrcp.pop %v1857
        %v1898 = vrcp.pop %v1859
        %v1899 = vrcp.pop %v1863
        %v1900 = vrcp.pop %v1865
        %v1901 = vrcp.pop %v1867
        %v1902 = vrcp.pop %v1869
        %v1903 = vmul.f32 %v1487, %v1871
        %v1904 = vmul.f32 %v1489, %v1872
        %v1905 = vmul.f32 %v1491, %v1873
        %v1906 = vmul.f32 %v1493, %v1874
        %v1907 = vmul.f32 %v1495, %v1875
        %v1908 = vmul.f32 %v1497, %v1876
        %v1909 = vmul.f32 %v1499, %v1877
        %v1910 = vmul.f32 %v1501, %v1878
        %v1911 = vmul.f32 %v1503, %v1879
        %v1912 = vmul.f32 %v1505, %v1880
        %v1913 = vmul.f32 %v1507, %v1881
        %v1914 = vmul.f32 %v1509, %v1882
        %v1915 = vmul.f32 %v1511, %v1883
        %v1916 = vmul.f32 %v1513, %v1884
        %v1917 = vmul.f32 %v1515, %v1885
        %v1918 = vmul.f32 %v1517, %v1886
        %v1919 = vmul.f32 %v1519, %v1887
        %v1920 = vmul.f32 %v1521, %v1888
        %v1921 = vmul.f32 %v1523, %v1889
        %v1922 = vmul.f32 %v1525, %v1890
        %v1923 = vmul.f32 %v1527, %v1891
        %v1924 = vmul.f32 %v1529, %v1892
        %v1925 = vmul.f32 %v1531, %v1893
        %v1926 = vmul.f32 %v1533, %v1894
        %v1927 = vmul.f32 %v1535, %v1895
        %v1928 = vmul.f32 %v1537, %v1896
        %v1929 = vmul.f32 %v1539, %v1897
        %v1930 = vmul.f32 %v1541, %v1898
        %v1931 = vmul.f32 %v1543, %v1899
        %v1932 = vmul.f32 %v1545, %v1900
        %v1933 = vmul.f32 %v1547, %v1901
        %v1934 = vmul.f32 %v1549, %v1902
        %1935 = vst [vmem:[%s343] sm:$0xff] %v1903
        %1936 = vst [vmem:[%s343 + $0x8] sm:$0xff] %v1904
        %1937 = vst [vmem:[%s343 + $0x10] sm:$0xff] %v1905
        %1938 = vst [vmem:[%s343 + $0x18] sm:$0xff] %v1906
        %1939 = vst [vmem:[%s343 + $0x20] sm:$0xff] %v1907
        %1940 = vst [vmem:[%s343 + $0x28] sm:$0xff] %v1908
        %1941 = vst [vmem:[%s343 + $0x30] sm:$0xff] %v1909
        %1942 = vst [vmem:[%s343 + $0x38] sm:$0xff] %v1910
        %1943 = vst [vmem:[%s343 + $0x40] sm:$0xff] %v1911
        %1944 = vst [vmem:[%s343 + $0x48] sm:$0xff] %v1912
        %1945 = vst [vmem:[%s343 + $0x50] sm:$0xff] %v1913
        %1946 = vst [vmem:[%s343 + $0x58] sm:$0xff] %v1914
        %1947 = vst [vmem:[%s343 + $0x60] sm:$0xff] %v1915
        %1948 = vst [vmem:[%s343 + $0x68] sm:$0xff] %v1916
        %1949 = vst [vmem:[%s343 + $0x70] sm:$0xff] %v1917
        %1950 = vst [vmem:[%s343 + $0x78] sm:$0xff] %v1918
        %1951 = vst [vmem:[%s343 + $0x80] sm:$0xff] %v1919
        %1952 = vst [vmem:[%s343 + $0x88] sm:$0xff] %v1920
        %1953 = vst [vmem:[%s343 + $0x90] sm:$0xff] %v1921
        %1954 = vst [vmem:[%s343 + $0x98] sm:$0xff] %v1922
        %1955 = vst [vmem:[%s343 + $0xa0] sm:$0xff] %v1923
        %1956 = vst [vmem:[%s343 + $0xa8] sm:$0xff] %v1924
        %1957 = vst [vmem:[%s343 + $0xb0] sm:$0xff] %v1925
        %1958 = vst [vmem:[%s343 + $0xb8] sm:$0xff] %v1926
        %1959 = vst [vmem:[%s343 + $0xc0] sm:$0xff] %v1927
        %1960 = vst [vmem:[%s343 + $0xc8] sm:$0xff] %v1928
        %1961 = vst [vmem:[%s343 + $0xd0] sm:$0xff] %v1929
        %1962 = vst [vmem:[%s343 + $0xd8] sm:$0xff] %v1930
        %1963 = vst [vmem:[%s343 + $0xe0] sm:$0xff] %v1931
        %1964 = vst [vmem:[%s343 + $0xe8] sm:$0xff] %v1932
        %1965 = vst [vmem:[%s343 + $0xf0] sm:$0xff] %v1933
        %1966 = vst [vmem:[%s343 + $0xf8] sm:$0xff] %v1934
        %s1967 = smul.u32 16, %s23
        %p1968 = scmp.lt.s32.totalorder %s1967, 127
        %s1969 = scalar_select %p1968, %s1967, 127
        %s1970 = smul.addr %s1969, 4
        %s1971 = smul.addr %s1970, 8
        %s1972 = scalar_lea.vmem %s6, %s1971
        %s1973 = smul.u32 16, %s23
        %p1974 = scmp.lt.s32.totalorder %s1973, 127
        %s1975 = scalar_select %p1974, %s1973, 127
        %s1976 = smul.addr %s1975, 2
        %s1977 = smul.addr %s1976, 8
        %s1978 = scalar_lea.vmem %s7, %s1977
        // Predicated region
        $region57: #{_lambda_.3} parent=43 // pred_check
          %p1979 = pneg %p172
        $region58: #{_lambda_.3} parent=43 // pred_check_branch
          %1981 = sbr.rel (%p1979) target = $region60
        $region59: #{_lambda_.3} parent=43 // pred_region
          %s1982 = smul.u32 16, %s23
        $region60: #{_lambda_.3} parent=43 // pred_fallthru
          _
        // Predicated region
        $region61: #{_lambda_.3} parent=43 // pred_check
          %p1983 = pneg %p198
        $region62: #{_lambda_.3} parent=43 // pred_check_branch
          %1985 = sbr.rel (%p1983) target = $region64
        $region63: #{_lambda_.3} parent=43 // pred_region
          %s1986 = smul.u32 16, %s23
        $region64: #{_lambda_.3} parent=43 // pred_fallthru
          _
      $region44: #{_lambda_.3} parent=5 // pred_fallthru
        _
      %p1987 = scmp.le.s32.totalorder 2, %s18
      // Predicated region
      $region65: #{_lambda_.3} parent=5 // pred_check
        %p1988 = pneg %p1987
      $region66: #{_lambda_.3} parent=5 // pred_check_branch
        %1990 = sbr.rel (%p1988) target = $region68
      $region67: #{_lambda_.3} parent=5 // pred_region
        %s1991 = ssub.s32 %s18, 2
        // Predicated region
        $region69: #{_lambda_.3} parent=67 // pred_check
          %p1992 = pneg %p178
        $region70: #{_lambda_.3} parent=67 // pred_check_branch
          %1994 = sbr.rel (%p1992) target = $region72
        $region71: #{_lambda_.3} parent=67 // pred_region
          %s1995 = smul.u32 16, %s24
          %p1996 = scmp.lt.s32.totalorder %s1995, 127
          %s1997 = scalar_select %p1996, %s1995, 127
          %s1998 = smul.addr %s1997, 4
          %s1999 = smul.addr %s1998, 8
          %s2000 = scalar_lea.vmem %s6, %s1999
        $region72: #{_lambda_.3} parent=67 // pred_fallthru
          _
        // Predicated region
        $region73: #{_lambda_.3} parent=67 // pred_check
          %p2001 = pneg %p204
        $region74: #{_lambda_.3} parent=67 // pred_check_branch
          %2003 = sbr.rel (%p2001) target = $region76
        $region75: #{_lambda_.3} parent=67 // pred_region
          %s2004 = smul.u32 16, %s24
          %p2005 = scmp.lt.s32.totalorder %s2004, 127
          %s2006 = scalar_select %p2005, %s2004, 127
          %s2007 = smul.addr %s2006, 2
          %s2008 = smul.addr %s2007, 8
          %s2009 = scalar_lea.vmem %s7, %s2008
        $region76: #{_lambda_.3} parent=67 // pred_fallthru
          _
      $region68: #{_lambda_.3} parent=5 // pred_fallthru
        _
    $region6: #{_lambda_.3} parent=1 // loop_footer
      %s22 = sadd.s32 1, %s18
    $region7: #{_lambda_.3} parent=1 // loop_footer_branch
      %17 = sbr.rel target = $region3
    $region8: #{_lambda_.3} parent=1 // loop_exit
      _
    %2010 = vsyncpa [#allocation3], 1
    %s2011 = scalar_lea.sflag [#allocation3], 1
    %2012 = vsyncpa %s2011, 1
    %2013 = vsyncpa [#allocation5], 1

// kernel: _lambda_.2
$region0: #{_lambda_.2}
  #allocation0 [shape = 'u32[]', space=smem, size = 0x4, offset = 0x4, fixed_abs, tag = 'smem constant byte address 0x4 - core index']
  #allocation1 [shape = 'u32[144,128]{1,0:T(1,128)}', space=vmem, size = 0x12000, scoped, tag = 'internal scratch']
  %s0 = inlined_call_operand.vmem [shape: f32[512,256], index: 0, kind: input, shape index: {}]
  %s1 = inlined_call_operand.vmem [shape: bf16[256,256], index: 1, kind: input, shape index: {}]
  %s2 = inlined_call_operand.vmem [shape: f32[1,256], index: 2, kind: input, shape index: {}]
  %s3 = inlined_call_operand.vmem [shape: f32[512,256], index: 3, kind: output, shape index: {}]
  %s4 = sld [smem:[#allocation0]]
  $region45: #{_lambda_.2} parent=0
    _
  %s6 = ssub.s32 1, %s4
  %s7 = scalar_select 0, %s6, %s4
  loop: start=0, step=1, limit=10
  $region2: #{_lambda_.2} parent=0 // loop_pre_header
    _
  $region3: #{_lambda_.2} parent=0 // loop_header
    %s9 = sphi 0, %s13
    %p10 = scmp.ge.s32.totalorder %s9, 10
    %s19 = sphi 0, %s21
    %s22 = sphi 0, %s19
    %s23 = sphi 0, %s22
    %s39 = sphi 0, %s23
    %s43 = sphi 0, %s43
    %s45 = sphi 0, %s43
    %s46 = sphi 0, %s45
    %s60 = sphi 0, %s46
    %s64 = sphi 0, %s64
    %s66 = sphi 0, %s64
    %s67 = sphi 0, %s66
    %s81 = sphi 0, %s67
    %s87 = sphi 0, %s89
    %s90 = sphi 0, %s87
    %s91 = sphi 0, %s90
    %s107 = sphi 0, %s91
  $region4: #{_lambda_.2} parent=0 // loop_header_branch
    %12 = sbr.rel (%p10) target = $region8
  $region5: #{_lambda_.2} parent=0 // loop_body
    %s14 = ssub.s32 %s9, 1
    %s15 = ssub.s32 %s9, 2
    %s16 = sadd.s32 %s9, 1
    %s17 = ssub.s32 %s9, %s16
    %p18 = scmp.eq.s32.totalorder %s17, 0
    %s20 = sadd.s32 %s19, 1
    %s21 = scalar_select %p18, %s19, %s20
    %p24 = pneg %p18
    %p25 = scmp.eq.s32.totalorder %s9, 7
    %p26 = por %p24, %p25
    %p27 = scmp.ne.s32.totalorder %s19, %s22
    %p28 = scmp.eq.s32.totalorder %s9, 0
    %p29 = por %p27, %p28
    %p30 = scmp.ne.s32.totalorder %s19, %s22
    %p31 = scmp.eq.s32.totalorder %s14, 7
    %p32 = por %p30, %p31
    %p33 = scmp.ne.s32.totalorder %s22, %s23
    %p34 = scmp.eq.s32.totalorder %s14, 0
    %p35 = por %p33, %p34
    %p36 = scmp.ne.s32.totalorder %s22, %s23
    %p37 = scmp.eq.s32.totalorder %s15, 7
    %p38 = por %p36, %p37
    %p40 = scmp.ne.s32.totalorder %s23, %s39
    %p41 = scmp.eq.s32.totalorder %s15, 0
    %p42 = por %p40, %p41
    %s44 = sadd.s32 %s43, 1
    %p47 = scmp.eq.s32.totalorder %s9, 7
    %p48 = scmp.ne.s32.totalorder %s43, %s45
    %p49 = scmp.eq.s32.totalorder %s9, 0
    %p50 = por %p48, %p49
    %p51 = scmp.ne.s32.totalorder %s43, %s45
    %p52 = scmp.eq.s32.totalorder %s14, 7
    %p53 = por %p51, %p52
    %p54 = scmp.ne.s32.totalorder %s45, %s46
    %p55 = scmp.eq.s32.totalorder %s14, 0
    %p56 = por %p54, %p55
    %p57 = scmp.ne.s32.totalorder %s45, %s46
    %p58 = scmp.eq.s32.totalorder %s15, 7
    %p59 = por %p57, %p58
    %p61 = scmp.ne.s32.totalorder %s46, %s60
    %p62 = scmp.eq.s32.totalorder %s15, 0
    %p63 = por %p61, %p62
    %s65 = sadd.s32 %s64, 1
    %p68 = scmp.eq.s32.totalorder %s9, 7
    %p69 = scmp.ne.s32.totalorder %s64, %s66
    %p70 = scmp.eq.s32.totalorder %s9, 0
    %p71 = por %p69, %p70
    %p72 = scmp.ne.s32.totalorder %s64, %s66
    %p73 = scmp.eq.s32.totalorder %s14, 7
    %p74 = por %p72, %p73
    %p75 = scmp.ne.s32.totalorder %s66, %s67
    %p76 = scmp.eq.s32.totalorder %s14, 0
    %p77 = por %p75, %p76
    %p78 = scmp.ne.s32.totalorder %s66, %s67
    %p79 = scmp.eq.s32.totalorder %s15, 7
    %p80 = por %p78, %p79
    %p82 = scmp.ne.s32.totalorder %s67, %s81
    %p83 = scmp.eq.s32.totalorder %s15, 0
    %p84 = por %p82, %p83
    %s85 = ssub.s32 %s9, %s16
    %p86 = scmp.eq.s32.totalorder %s85, 0
    %s88 = sadd.s32 %s87, 1
    %s89 = scalar_select %p86, %s87, %s88
    %p92 = pneg %p86
    %p93 = scmp.eq.s32.totalorder %s9, 7
    %p94 = por %p92, %p93
    %p95 = scmp.ne.s32.totalorder %s87, %s90
    %p96 = scmp.eq.s32.totalorder %s9, 0
    %p97 = por %p95, %p96
    %p98 = scmp.ne.s32.totalorder %s87, %s90
    %p99 = scmp.eq.s32.totalorder %s14, 7
    %p100 = por %p98, %p99
    %p101 = scmp.ne.s32.totalorder %s90, %s91
    %p102 = scmp.eq.s32.totalorder %s14, 0
    %p103 = por %p101, %p102
    %p104 = scmp.ne.s32.totalorder %s90, %s91
    %p105 = scmp.eq.s32.totalorder %s15, 7
    %p106 = por %p104, %p105
    %p108 = scmp.ne.s32.totalorder %s91, %s107
    %p109 = scmp.eq.s32.totalorder %s15, 0
    %p110 = por %p108, %p109
    %p111 = scmp.le.s32.totalorder 1, %s9
    %p112 = scmp.lt.s32.totalorder %s9, 9
    %p113 = pnand %p111, %p112
    %p114 = pneg %p113
    // Predicated region
    $region9: #{_lambda_.2} parent=5 // pred_check
      _
    $region10: #{_lambda_.2} parent=5 // pred_check_branch
      %116 = sbr.rel (%p113) target = $region12
    $region11: #{_lambda_.2} parent=5 // pred_region
      %s117 = ssub.s32 %s9, 1
      // Predicated region
      $region13: #{_lambda_.2} parent=11 // pred_check
        %p118 = pneg %p56
      $region14: #{_lambda_.2} parent=11 // pred_check_branch
        %120 = sbr.rel (%p118) target = $region16
      $region15: #{_lambda_.2} parent=11 // pred_region
        _
      $region16: #{_lambda_.2} parent=11 // pred_fallthru
        _
      // Predicated region
      $region17: #{_lambda_.2} parent=11 // pred_check
        %p121 = pneg %p77
      $region18: #{_lambda_.2} parent=11 // pred_check_branch
        %123 = sbr.rel (%p121) target = $region20
      $region19: #{_lambda_.2} parent=11 // pred_region
        _
      $region20: #{_lambda_.2} parent=11 // pred_fallthru
        _
    $region12: #{_lambda_.2} parent=5 // pred_fallthru
      _
    %p124 = scmp.lt.s32.totalorder %s9, 8
    // Predicated region
    $region21: #{_lambda_.2} parent=5 // pred_check
      %p125 = pneg %p124
    $region22: #{_lambda_.2} parent=5 // pred_check_branch
      %127 = sbr.rel (%p125) target = $region24
    $region23: #{_lambda_.2} parent=5 // pred_region
      // Predicated region
      $region25: #{_lambda_.2} parent=23 // pred_check
        %p128 = pneg %p29
      $region26: #{_lambda_.2} parent=23 // pred_check_branch
        %130 = sbr.rel (%p128) target = $region28
      $region27: #{_lambda_.2} parent=23 // pred_region
        %s131 = smul.u32 8, %s9
        %p132 = scmp.lt.s32.totalorder %s131, 63
        %s133 = scalar_select %p132, %s131, 63
        %s134 = smul.addr %s133, 2
        %s135 = smul.addr %s134, 8
        %s136 = scalar_lea.vmem %s0, %s135
        %s137 = smul.u32 8, %s9
      $region28: #{_lambda_.2} parent=23 // pred_fallthru
        _
    $region24: #{_lambda_.2} parent=5 // pred_fallthru
      _
    %p138 = scmp.le.s32.totalorder 1, %s9
    %p139 = scmp.lt.s32.totalorder %s9, 9
    %p140 = pnand %p138, %p139
    %p141 = pneg %p140
    // Predicated region
    $region29: #{_lambda_.2} parent=5 // pred_check
      _
    $region30: #{_lambda_.2} parent=5 // pred_check_branch
      %143 = sbr.rel (%p140) target = $region32
    $region31: #{_lambda_.2} parent=5 // pred_region
      %s144 = ssub.s32 %s9, 1
      %s145 = smul.u32 8, %s14
      %p146 = scmp.lt.s32.totalorder %s145, 63
      %s147 = scalar_select %p146, %s145, 63
      %s148 = smul.addr %s147, 2
      %s149 = smul.addr %s148, 8
      %s150 = scalar_lea.vmem %s0, %s149
      %p151 = pneg %p35
      %p152 = pneg %p32
      %p153 = pneg %p56
      %p154 = pneg %p53
      %p155 = pneg %p77
      %p156 = pneg %p74
      %p157 = pneg %p103
      %p158 = pneg %p100
      %s159 = smul.u32 8, %s14
      %p160 = scmp.lt.s32.totalorder %s159, 63
      %s161 = scalar_select %p160, %s159, 63
      %s162 = smul.addr %s161, 2
      %s163 = smul.addr %s162, 8
      %s164 = scalar_lea.vmem %s3, %s163
      %s165 = smul.u32 8, %s14
      %p166 = scmp.lt.s32.totalorder %s165, 63
      %s167 = scalar_select %p166, %s165, 63
      %s168 = smul.addr %s167, 2
      %s169 = smul.addr %s168, 8
      %s170 = scalar_lea.vmem %s0, %s169
      %s171 = smul.u32 8, %s14
      %s172 = smul.u32 8, %s14
      %p173 = scmp.lt.s32.totalorder %s172, 63
      %s174 = scalar_select %p173, %s172, 63
      %s175 = smul.addr %s174, 2
      %s176 = smul.addr %s175, 8
      %s177 = scalar_lea.vmem %s3, %s176
      %s178 = smul.u32 8, %s14
      %v179 = vld [vmem:[%s170] sm:$0xff]
      %v180 = vld [vmem:[%s170 + $0x8] sm:$0xff]
      %v181 = vld [vmem:[%s170 + $0x10] sm:$0xff]
      %v182 = vld [vmem:[%s170 + $0x18] sm:$0xff]
      %v183 = vld [vmem:[%s170 + $0x20] sm:$0xff]
      %v184 = vld [vmem:[%s170 + $0x28] sm:$0xff]
      %v185 = vld [vmem:[%s170 + $0x30] sm:$0xff]
      %v186 = vld [vmem:[%s170 + $0x38] sm:$0xff]
      %v187 = vld [vmem:[%s170 + $0x40] sm:$0xff]
      %v188 = vld [vmem:[%s170 + $0x48] sm:$0xff]
      %v189 = vld [vmem:[%s170 + $0x50] sm:$0xff]
      %v190 = vld [vmem:[%s170 + $0x58] sm:$0xff]
      %v191 = vld [vmem:[%s170 + $0x60] sm:$0xff]
      %v192 = vld [vmem:[%s170 + $0x68] sm:$0xff]
      %v193 = vld [vmem:[%s170 + $0x70] sm:$0xff]
      %v194 = vld [vmem:[%s170 + $0x78] sm:$0xff]
      %v195 = vpack.c.bf16 %v181, %v179
      %v196 = vpack.c.bf16 %v182, %v180
      %v197 = vpack.c.bf16 %v185, %v183
      %v198 = vpack.c.bf16 %v186, %v184
      %v199 = vpack.c.bf16 %v189, %v187
      %v200 = vpack.c.bf16 %v190, %v188
      %v201 = vpack.c.bf16 %v193, %v191
      %v202 = vpack.c.bf16 %v194, %v192
      %v203 = vld [vmem:[%s1] sm:$0xff]
      %v204 = vld [vmem:[%s1 + $0x8] sm:$0xff]
      %v205 = vld [vmem:[%s1 + $0x10] sm:$0xff]
      %v206 = vld [vmem:[%s1 + $0x18] sm:$0xff]
      %v207 = vld [vmem:[%s1 + $0x20] sm:$0xff]
      %v208 = vld [vmem:[%s1 + $0x28] sm:$0xff]
      %v209 = vld [vmem:[%s1 + $0x30] sm:$0xff]
      %v210 = vld [vmem:[%s1 + $0x38] sm:$0xff]
      %v211 = vld [vmem:[%s1 + $0x40] sm:$0xff]
      %v212 = vld [vmem:[%s1 + $0x48] sm:$0xff]
      %v213 = vld [vmem:[%s1 + $0x50] sm:$0xff]
      %v214 = vld [vmem:[%s1 + $0x58] sm:$0xff]
      %v215 = vld [vmem:[%s1 + $0x60] sm:$0xff]
      %v216 = vld [vmem:[%s1 + $0x68] sm:$0xff]
      %v217 = vld [vmem:[%s1 + $0x70] sm:$0xff]
      %v218 = vld [vmem:[%s1 + $0x78] sm:$0xff]
      %v219 = vld [vmem:[%s1 + $0x80] sm:$0xff]
      %v220 = vld [vmem:[%s1 + $0x88] sm:$0xff]
      %v221 = vld [vmem:[%s1 + $0x90] sm:$0xff]
      %v222 = vld [vmem:[%s1 + $0x98] sm:$0xff]
      %v223 = vld [vmem:[%s1 + $0xa0] sm:$0xff]
      %v224 = vld [vmem:[%s1 + $0xa8] sm:$0xff]
      %v225 = vld [vmem:[%s1 + $0xb0] sm:$0xff]
      %v226 = vld [vmem:[%s1 + $0xb8] sm:$0xff]
      %v227 = vld [vmem:[%s1 + $0xc0] sm:$0xff]
      %v228 = vld [vmem:[%s1 + $0xc8] sm:$0xff]
      %v229 = vld [vmem:[%s1 + $0xd0] sm:$0xff]
      %v230 = vld [vmem:[%s1 + $0xd8] sm:$0xff]
      %v231 = vld [vmem:[%s1 + $0xe0] sm:$0xff]
      %v232 = vld [vmem:[%s1 + $0xe8] sm:$0xff]
      %v233 = vld [vmem:[%s1 + $0xf0] sm:$0xff]
      %v234 = vld [vmem:[%s1 + $0xf8] sm:$0xff]
      %v235 = vld [vmem:[%s2] sm:$0x3]
      %v237 = vlaneseq
      %v238 = vshrl.u32 %v237, 7
      %v239 = vsub.s32 0, %v238
      %v240 = vrot.slane %v235, %v239
      %v241 = vlaneseq
      %v242 = vshrl.u32 %v241, 7
      %v243 = vsub.s32 1, %v242
      %v244 = vrot.slane %v235, %v243
      %v279 = vunpack.c.l.b16 %v203
      %v280 = vunpack.c.h.b16 %v203
      %v281 = vunpack.c.l.b16 %v204
      %v282 = vunpack.c.h.b16 %v204
      %v283 = vunpack.c.l.b16 %v205
      %v284 = vunpack.c.h.b16 %v205
      %v285 = vunpack.c.l.b16 %v206
      %v286 = vunpack.c.h.b16 %v206
      %v287 = vunpack.c.l.b16 %v207
      %v288 = vunpack.c.h.b16 %v207
      %v289 = vunpack.c.l.b16 %v208
      %v290 = vunpack.c.h.b16 %v208
      %v291 = vunpack.c.l.b16 %v209
      %v292 = vunpack.c.h.b16 %v209
      %v293 = vunpack.c.l.b16 %v210
      %v294 = vunpack.c.h.b16 %v210
      %v295 = vunpack.c.l.b16 %v211
      %v296 = vunpack.c.h.b16 %v211
      %v297 = vunpack.c.l.b16 %v212
      %v298 = vunpack.c.h.b16 %v212
      %v299 = vunpack.c.l.b16 %v213
      %v300 = vunpack.c.h.b16 %v213
      %v301 = vunpack.c.l.b16 %v214
      %v302 = vunpack.c.h.b16 %v214
      %v303 = vunpack.c.l.b16 %v215
      %v304 = vunpack.c.h.b16 %v215
      %v305 = vunpack.c.l.b16 %v216
      %v306 = vunpack.c.h.b16 %v216
      %v307 = vunpack.c.l.b16 %v217
      %v308 = vunpack.c.h.b16 %v217
      %v309 = vunpack.c.l.b16 %v218
      %v310 = vunpack.c.h.b16 %v218
      %v311 = vunpack.c.l.b16 %v219
      %v312 = vunpack.c.h.b16 %v219
      %v313 = vunpack.c.l.b16 %v220
      %v314 = vunpack.c.h.b16 %v220
      %v315 = vunpack.c.l.b16 %v221
      %v316 = vunpack.c.h.b16 %v221
      %v317 = vunpack.c.l.b16 %v222
      %v318 = vunpack.c.h.b16 %v222
      %v319 = vunpack.c.l.b16 %v223
      %v320 = vunpack.c.h.b16 %v223
      %v321 = vunpack.c.l.b16 %v224
      %v322 = vunpack.c.h.b16 %v224
      %v323 = vunpack.c.l.b16 %v225
      %v324 = vunpack.c.h.b16 %v225
      %v325 = vunpack.c.l.b16 %v226
      %v326 = vunpack.c.h.b16 %v226
      %v327 = vunpack.c.l.b16 %v227
      %v328 = vunpack.c.h.b16 %v227
      %v329 = vunpack.c.l.b16 %v228
      %v330 = vunpack.c.h.b16 %v228
      %v331 = vunpack.c.l.b16 %v229
      %v332 = vunpack.c.h.b16 %v229
      %v333 = vunpack.c.l.b16 %v230
      %v334 = vunpack.c.h.b16 %v230
      %v335 = vunpack.c.l.b16 %v231
      %v336 = vunpack.c.h.b16 %v231
      %v337 = vunpack.c.l.b16 %v232
      %v338 = vunpack.c.h.b16 %v232
      %v339 = vunpack.c.l.b16 %v233
      %v340 = vunpack.c.h.b16 %v233
      %v341 = vunpack.c.l.b16 %v234
      %v342 = vunpack.c.h.b16 %v234
      %v343 = vpack.c.b16 %v281, %v279
      %v344 = vpack.c.b16 %v282, %v280
      %v345 = vpack.c.b16 %v285, %v283
      %v346 = vpack.c.b16 %v286, %v284
      %v347 = vpack.c.b16 %v289, %v287
      %v348 = vpack.c.b16 %v290, %v288
      %v349 = vpack.c.b16 %v293, %v291
      %v350 = vpack.c.b16 %v294, %v292
      %v351 = vpack.c.b16 %v297, %v295
      %v352 = vpack.c.b16 %v298, %v296
      %v353 = vpack.c.b16 %v301, %v299
      %v354 = vpack.c.b16 %v302, %v300
      %v355 = vpack.c.b16 %v305, %v303
      %v356 = vpack.c.b16 %v306, %v304
      %v357 = vpack.c.b16 %v309, %v307
      %v358 = vpack.c.b16 %v310, %v308
      %v359 = vpack.c.b16 %v313, %v311
      %v360 = vpack.c.b16 %v314, %v312
      %v361 = vpack.c.b16 %v317, %v315
      %v362 = vpack.c.b16 %v318, %v316
      %v363 = vpack.c.b16 %v321, %v319
      %v364 = vpack.c.b16 %v322, %v320
      %v365 = vpack.c.b16 %v325, %v323
      %v366 = vpack.c.b16 %v326, %v324
      %v367 = vpack.c.b16 %v329, %v327
      %v368 = vpack.c.b16 %v330, %v328
      %v369 = vpack.c.b16 %v333, %v331
      %v370 = vpack.c.b16 %v334, %v332
      %v371 = vpack.c.b16 %v337, %v335
      %v372 = vpack.c.b16 %v338, %v336
      %v373 = vpack.c.b16 %v341, %v339
      %v374 = vpack.c.b16 %v342, %v340
      %407 = vmatprep.subr.bf16.mxu0 %v344
      %408 = vmatpush1.bf16.msra.mxu0 %v343
      %409 = vmatprep.subr.bf16.mxu0 %v346
      %410 = vmatpush1.bf16.msra.mxu0 %v345
      %411 = vmatprep.subr.bf16.mxu0 %v348
      %412 = vmatpush1.bf16.msra.mxu0 %v347
      %413 = vmatprep.subr.bf16.mxu0 %v350
      %414 = vmatpush1.bf16.msra.mxu0 %v349
      %415 = vmatprep.subr.bf16.mxu0 %v352
      %416 = vmatpush1.bf16.msra.mxu0 %v351
      %417 = vmatprep.subr.bf16.mxu0 %v354
      %418 = vmatpush1.bf16.msra.mxu0 %v353
      %419 = vmatprep.subr.bf16.mxu0 %v356
      %420 = vmatpush1.bf16.msra.mxu0 %v355
      %421 = vmatprep.subr.bf16.mxu0 %v358
      %422 = vmatpush1.bf16.msra.mxu0 %v357
      %423 = vmatprep.subr.bf16.mxu0 %v360
      %424 = vmatpush1.bf16.msra.mxu0 %v359
      %425 = vmatprep.subr.bf16.mxu0 %v362
      %426 = vmatpush1.bf16.msra.mxu0 %v361
      %427 = vmatprep.subr.bf16.mxu0 %v364
      %428 = vmatpush1.bf16.msra.mxu0 %v363
      %429 = vmatprep.subr.bf16.mxu0 %v366
      %430 = vmatpush1.bf16.msra.mxu0 %v365
      %431 = vmatprep.subr.bf16.mxu0 %v368
      %432 = vmatpush1.bf16.msra.mxu0 %v367
      %433 = vmatprep.subr.bf16.mxu0 %v370
      %434 = vmatpush1.bf16.msra.mxu0 %v369
      %435 = vmatprep.subr.bf16.mxu0 %v372
      %436 = vmatpush1.bf16.msra.mxu0 %v371
      %437 = vmatprep.subr.bf16.mxu0 %v374
      %438 = vmatpush1.bf16.msra.mxu0 %v373
      %439 = vmatprep.mubr.bf16.mxu0 %v196
      %440 = vmatmul.mubr.bf16.gmra.mrb[0].mxu0 %v195
      %v441 = vpop.f32.mrb[0].mxu0
      %v442 = vadd.f32 %v240, %v441
      %v443 = vpop.f32.mrb[0].mxu0
      %v444 = vadd.f32 %v244, %v443
      %v445 = vpop.f32.mrb[0].mxu0
      %v446 = vadd.f32 %v240, %v445
      %v447 = vpop.f32.mrb[0].mxu0
      %v448 = vadd.f32 %v244, %v447
      %449 = vmatprep.mubr.bf16.mxu0 %v198
      %450 = vmatmul.mubr.bf16.gmra.mrb[0].mxu0 %v197
      %v451 = vpop.f32.mrb[0].mxu0
      %v452 = vadd.f32 %v240, %v451
      %v453 = vpop.f32.mrb[0].mxu0
      %v454 = vadd.f32 %v244, %v453
      %v455 = vpop.f32.mrb[0].mxu0
      %v456 = vadd.f32 %v240, %v455
      %v457 = vpop.f32.mrb[0].mxu0
      %v458 = vadd.f32 %v244, %v457
      %459 = vmatprep.mubr.bf16.mxu0 %v200
      %460 = vmatmul.mubr.bf16.gmra.mrb[0].mxu0 %v199
      %v461 = vpop.f32.mrb[0].mxu0
      %v462 = vadd.f32 %v240, %v461
      %v463 = vpop.f32.mrb[0].mxu0
      %v464 = vadd.f32 %v244, %v463
      %v465 = vpop.f32.mrb[0].mxu0
      %v466 = vadd.f32 %v240, %v465
      %v467 = vpop.f32.mrb[0].mxu0
      %v468 = vadd.f32 %v244, %v467
      %469 = vmatprep.mubr.bf16.mxu0 %v202
      %470 = vmatmul.mubr.bf16.gmra.mrb[0].mxu0 %v201
      %v471 = vpop.f32.mrb[0].mxu0
      %v472 = vadd.f32 %v240, %v471
      %v473 = vpop.f32.mrb[0].mxu0
      %v474 = vadd.f32 %v244, %v473
      %v475 = vpop.f32.mrb[0].mxu0
      %v476 = vadd.f32 %v240, %v475
      %v477 = vpop.f32.mrb[0].mxu0
      %v478 = vadd.f32 %v244, %v477
      %479 = vdwg.mxu0
      %480 = vst [vmem:[%s177] sm:$0xff] %v442
      %481 = vst [vmem:[%s177 + $0x8] sm:$0xff] %v444
      %482 = vst [vmem:[%s177 + $0x10] sm:$0xff] %v446
      %483 = vst [vmem:[%s177 + $0x18] sm:$0xff] %v448
      %484 = vst [vmem:[%s177 + $0x20] sm:$0xff] %v452
      %485 = vst [vmem:[%s177 + $0x28] sm:$0xff] %v454
      %486 = vst [vmem:[%s177 + $0x30] sm:$0xff] %v456
      %487 = vst [vmem:[%s177 + $0x38] sm:$0xff] %v458
      %488 = vst [vmem:[%s177 + $0x40] sm:$0xff] %v462
      %489 = vst [vmem:[%s177 + $0x48] sm:$0xff] %v464
      %490 = vst [vmem:[%s177 + $0x50] sm:$0xff] %v466
      %491 = vst [vmem:[%s177 + $0x58] sm:$0xff] %v468
      %492 = vst [vmem:[%s177 + $0x60] sm:$0xff] %v472
      %493 = vst [vmem:[%s177 + $0x68] sm:$0xff] %v474
      %494 = vst [vmem:[%s177 + $0x70] sm:$0xff] %v476
      %495 = vst [vmem:[%s177 + $0x78] sm:$0xff] %v478
      %s496 = smul.u32 8, %s14
      %p497 = scmp.lt.s32.totalorder %s496, 63
      %s498 = scalar_select %p497, %s496, 63
      %s499 = smul.addr %s498, 2
      %s500 = smul.addr %s499, 8
      %s501 = scalar_lea.vmem %s3, %s500
      // Predicated region
      $region33: #{_lambda_.2} parent=31 // pred_check
        %p502 = pneg %p100
      $region34: #{_lambda_.2} parent=31 // pred_check_branch
        %504 = sbr.rel (%p502) target = $region36
      $region35: #{_lambda_.2} parent=31 // pred_region
        %s505 = smul.u32 8, %s14
      $region36: #{_lambda_.2} parent=31 // pred_fallthru
        _
    $region32: #{_lambda_.2} parent=5 // pred_fallthru
      _
    %p506 = scmp.le.s32.totalorder 2, %s9
    // Predicated region
    $region37: #{_lambda_.2} parent=5 // pred_check
      %p507 = pneg %p506
    $region38: #{_lambda_.2} parent=5 // pred_check_branch
      %509 = sbr.rel (%p507) target = $region40
    $region39: #{_lambda_.2} parent=5 // pred_region
      %s510 = ssub.s32 %s9, 2
      // Predicated region
      $region41: #{_lambda_.2} parent=39 // pred_check
        %p511 = pneg %p106
      $region42: #{_lambda_.2} parent=39 // pred_check_branch
        %513 = sbr.rel (%p511) target = $region44
      $region43: #{_lambda_.2} parent=39 // pred_region
        %s514 = smul.u32 8, %s15
        %p515 = scmp.lt.s32.totalorder %s514, 63
        %s516 = scalar_select %p515, %s514, 63
        %s517 = smul.addr %s516, 2
        %s518 = smul.addr %s517, 8
        %s519 = scalar_lea.vmem %s3, %s518
      $region44: #{_lambda_.2} parent=39 // pred_fallthru
        _
    $region40: #{_lambda_.2} parent=5 // pred_fallthru
      _
  $region6: #{_lambda_.2} parent=0 // loop_footer
    %s13 = sadd.s32 1, %s9
  $region7: #{_lambda_.2} parent=0 // loop_footer_branch
    %8 = sbr.rel target = $region3
  $region8: #{_lambda_.2} parent=0 // loop_exit
    _

</llo_original>
